<compile_context>
chip_gen: v6e
topology: v6e:2x2x1
jax: 0.10.0
libtpu: 0.0.40
codegen_flags: <defaults>
</compile_context>

<pallas_src>
import functools
import math

import jax
import jax.numpy as jnp
from jax.experimental import pallas as pl
from jax.experimental.pallas import tpu as pltpu


def _round_up(n, m):
    return ((n + m - 1) // m) * m


# --------------------------------------------------------------------------
# Fused Decoder kernel: wavefront LSTM (all layers) + FC head, one invocation.
# --------------------------------------------------------------------------
def _decoder_kernel(L, T, B, H, Dp, F, x_ref, hc0_ref, wl_ref, misc_ref, out_ref):
    """Refs:
      x_ref    : (T*B, Dp)          f32   time-major, feature-padded input
      hc0_ref  : (2*L, B, H)        f32   rows [0:L) = h0, rows [L:2L) = c0
      wl_ref   : (Dp + L*H, L*4H)   bf16  [padded Wih_0 ; fused recurrent RHS]
      misc_ref : (MR, MC)           f32   row 0: folded LSTM biases (L*4H)
                                          rows [8:8+H): fc1 weight (H,F)
                                          rows [8+H:8+H+F): fc2 weight (F,1)
                                          row 8+H+F: [b1 | b2]
      out_ref  : (NR, NC)           f32   packed [h_n ; c_n ; out] tile
    """
    G = 4 * H
    LG = L * G

    # ------------- hoisted prep (off the serial critical path) -------------
    x_bf = x_ref[...].astype(jnp.bfloat16)                 # (T*B, Dp)
    wih0 = wl_ref[0:Dp, :]                                 # (Dp, LG) bf16; cols >= G are 0
    rfused = wl_ref[Dp:Dp + L * H, :]                      # (L*H, LG) bf16

    bias_row = misc_ref[0:1, 0:LG]                         # (1, LG) f32
    bias_b = jnp.broadcast_to(bias_row, (B, LG))           # hoisted broadcast

    # Layer-0 input projection for ALL timesteps in one MXU pass.  Columns
    # belonging to layers >= 1 are exactly zero by construction of wih0.
    gxf = jnp.dot(x_bf, wih0, preferred_element_type=jnp.float32)   # (T*B, LG) f32

    hs = [hc0_ref[l] for l in range(L)]                    # each (B, H) f32
    cs = [hc0_ref[L + l] for l in range(L)]

    # ------ wavefront recurrence: T + L - 1 fused (B,L*H)@(L*H,L*4H) -------
    for s in range(T + L - 1):                             # static -> fully unrolled
        lhs = jnp.concatenate(hs, axis=-1).astype(jnp.bfloat16)       # (B, L*H)
        gates = jnp.dot(lhs, rfused,
                        preferred_element_type=jnp.float32) + bias_b  # (B, LG) f32
        if s < T:                                          # add layer-0 input proj
            gates = gates + gxf[s * B:(s + 1) * B, :]
        sig = jax.nn.sigmoid(gates)                        # one EUP pass, all layers
        th = jnp.tanh(gates)                               # one EUP pass, all layers
        new_hs = list(hs)
        new_cs = list(cs)
        for l in range(L):
            t = s - l                                      # timestep layer l is at
            if 0 <= t < T:
                o = l * G
                i_g = sig[:, o + 0 * H:o + 1 * H]
                f_g = sig[:, o + 1 * H:o + 2 * H]
                g_g = th[:, o + 2 * H:o + 3 * H]
                o_g = sig[:, o + 3 * H:o + 4 * H]
                c_new = f_g * cs[l] + i_g * g_g
                new_cs[l] = c_new
                new_hs[l] = o_g * jnp.tanh(c_new)
        hs, cs = new_hs, new_cs

    # ----------------- head: fc1 -> ReLU -> fc2 (f32) ----------------------
    w1 = misc_ref[8:8 + H, 0:F]                            # (H, F)
    w2 = misc_ref[8 + H:8 + H + F, 0:1]                    # (F, 1)
    fb = misc_ref[8 + H + F:8 + H + F + 1, 0:F + 1]        # (1, F+1)
    b1 = fb[:, 0:F]
    b2 = fb[:, F:F + 1]
    hid = jnp.dot(hs[L - 1], w1, preferred_element_type=jnp.float32) + b1
    hid = jnp.maximum(hid, 0.0)
    out = jnp.dot(hid, w2, preferred_element_type=jnp.float32) + b2   # (B, 1)

    # ------------- single lane-dense packed output tile --------------------
    out_ref[...] = jnp.zeros_like(out_ref)                 # deterministic padding
    for l in range(L):
        out_ref[l * B:(l + 1) * B, 0:H] = hs[l]
        out_ref[(L + l) * B:(L + l + 1) * B, 0:H] = cs[l]
    out_ref[0:B, H:H + 1] = out


# --------------------------------------------------------------------------
# Wrapper: per-call layout plumbing + pallas_call + output unpacking.
# --------------------------------------------------------------------------
def decoder_forward(x_btd, h_lbh, c_lbh, packed):
    """x:[B,T,input_size], h/c:[num_layers,B,H] -> (out:[B,1], h_n, c_n)."""
    D, Dp, H, L, F = packed["dims"]
    B, T, _ = x_btd.shape
    G = 4 * H

    # Tiny wrapper-side layout plumbing (not compute): time-major x, feature
    # pad to the bf16-tile-aligned Dp, and one h0/c0 slab.
    x_tb = jnp.transpose(x_btd, (1, 0, 2)).reshape(T * B, D)
    x_tb = jnp.pad(x_tb, ((0, 0), (0, Dp - D)))
    hc0 = jnp.concatenate([h_lbh, c_lbh], axis=0)          # (2L, B, H)

    NR = _round_up(max(2 * L * B, 8), 8)
    NC = _round_up(max(H + 1, 128), 128)

    kernel = functools.partial(_decoder_kernel, L, T, B, H, Dp, F)
    vmem_spec = pl.BlockSpec(memory_space=pltpu.MemorySpace.VMEM)
    packed_out = pl.pallas_call(
        kernel,
        out_shape=jax.ShapeDtypeStruct((NR, NC), jnp.float32),
        in_specs=[vmem_spec, vmem_spec, vmem_spec, vmem_spec],
        out_specs=vmem_spec,
        compiler_params=pltpu.CompilerParams(vmem_limit_bytes=16 * 1024 * 1024),
        # No grid: all operands + intermediates are VMEM-resident (<200 KiB).
    )(x_tb, hc0, packed["wlstm"], packed["misc"])

    h_n = packed_out[0:L * B, 0:H].reshape(L, B, H)
    c_n = packed_out[L * B:2 * L * B, 0:H].reshape(L, B, H)
    out = packed_out[0:B, H:H + 1]
    return out, h_n, c_n


# --------------------------------------------------------------------------
# Parameter init (matches nn.LSTM / nn.Linear shapes) + lane-dense packing.
# --------------------------------------------------------------------------
def init_params(key, input_size, hidden_size, num_layers, fcc_intermediate):
    params = {"lstm": []}
    k_lstm = 1.0 / math.sqrt(hidden_size)
    for layer in range(num_layers):
        d_in = input_size if layer == 0 else hidden_size
        key, k1, k2, k3, k4 = jax.random.split(key, 5)
        w_ih = jax.random.uniform(k1, (4 * hidden_size, d_in),
                                  minval=-k_lstm, maxval=k_lstm, dtype=jnp.float32)
        w_hh = jax.random.uniform(k2, (4 * hidden_size, hidden_size),
                                  minval=-k_lstm, maxval=k_lstm, dtype=jnp.float32)
        b_ih = jax.random.uniform(k3, (4 * hidden_size,),
                                  minval=-k_lstm, maxval=k_lstm, dtype=jnp.float32)
        b_hh = jax.random.uniform(k4, (4 * hidden_size,),
                                  minval=-k_lstm, maxval=k_lstm, dtype=jnp.float32)
        # pre-transpose + fold biases
        params["lstm"].append((w_ih.T, w_hh.T, (b_ih + b_hh)[None, :]))

    k_fc1 = 1.0 / math.sqrt(hidden_size)
    key, k1, k2 = jax.random.split(key, 3)
    w1 = jax.random.uniform(k1, (fcc_intermediate, hidden_size),
                            minval=-k_fc1, maxval=k_fc1, dtype=jnp.float32)
    b1 = jax.random.uniform(k2, (fcc_intermediate,),
                            minval=-k_fc1, maxval=k_fc1, dtype=jnp.float32)
    k_fc2 = 1.0 / math.sqrt(fcc_intermediate)
    key, k1, k2 = jax.random.split(key, 3)
    w2 = jax.random.uniform(k1, (1, fcc_intermediate),
                            minval=-k_fc2, maxval=k_fc2, dtype=jnp.float32)
    b2 = jax.random.uniform(k2, (1,),
                            minval=-k_fc2, maxval=k_fc2, dtype=jnp.float32)
    params["w1"] = w1.T
    params["b1"] = b1[None, :]
    params["w2"] = w2.T
    params["b2"] = b2[None, :]
    return params


def pack_params(params, input_size, hidden_size, num_layers, fcc_intermediate):
    """Pack the 10 weight/bias arrays into one bf16 slab + one f32 slab."""
    D, H, L, F = input_size, hidden_size, num_layers, fcc_intermediate
    G = 4 * H
    LG = L * G
    Dp = _round_up(max(D, 16), 16)        # bf16 sublane-tile aligned sections

    # --- bf16 LSTM matmul slab: [padded Wih_0 ; fused block recurrent RHS] ---
    wih0 = jnp.zeros((Dp, LG), jnp.float32)
    wih0 = wih0.at[0:D, 0:G].set(params["lstm"][0][0])            # (D, 4H)
    R = jnp.zeros((L * H, LG), jnp.float32)
    for l in range(L):
        w_ih_t, w_hh_t, _ = params["lstm"][l]
        R = R.at[l * H:(l + 1) * H, l * G:(l + 1) * G].set(w_hh_t)
        if l >= 1:
            R = R.at[(l - 1) * H:l * H, l * G:(l + 1) * G].set(w_ih_t)
    wlstm = jnp.concatenate([wih0, R], axis=0).astype(jnp.bfloat16)

    # --- f32 misc slab: folded LSTM biases + fc head (8-row aligned) ---
    MC = max(LG, 128, F + 1)
    MR = _round_up(8 + H + F + 1, 8)
    misc = jnp.zeros((MR, MC), jnp.float32)
    bias_cat = jnp.concatenate([params["lstm"][l][2].reshape(-1) for l in range(L)])
    misc = misc.at[0, 0:LG].set(bias_cat)
    misc = misc.at[8:8 + H, 0:F].set(params["w1"])
    misc = misc.at[8 + H:8 + H + F, 0:1].set(params["w2"])
    misc = misc.at[8 + H + F, 0:F].set(params["b1"].reshape(-1))
    misc = misc.at[8 + H + F, F].set(params["b2"].reshape(-1)[0])

    return {"wlstm": wlstm, "misc": misc, "dims": (D, Dp, H, L, F)}


# --------------------------------------------------------------------------
# Pure-JAX f32 reference (mirrors torch.nn.LSTM math) for a correctness check.
# --------------------------------------------------------------------------
def decoder_reference(x_btd, h_lbh, c_lbh, params):
    num_layers = h_lbh.shape[0]
    seq = x_btd
    h_finals, c_finals = [], []
    for layer in range(num_layers):
        w_ih, w_hh, b = params["lstm"][layer]
        H = w_hh.shape[0]
        h = h_lbh[layer]
        c = c_lbh[layer]
        outs = []
        for t in range(seq.shape[1]):
            gates = seq[:, t, :] @ w_ih + h @ w_hh + b
            i_g = jax.nn.sigmoid(gates[:, 0 * H:1 * H])
            f_g = jax.nn.sigmoid(gates[:, 1 * H:2 * H])
            g_g = jnp.tanh(gates[:, 2 * H:3 * H])
            o_g = jax.nn.sigmoid(gates[:, 3 * H:4 * H])
            c = f_g * c + i_g * g_g
            h = o_g * jnp.tanh(c)
            outs.append(h)
        seq = jnp.stack(outs, axis=1)
        h_finals.append(h)
        c_finals.append(c)
    last = seq[:, -1, :]
    out = jnp.maximum(last @ params["w1"] + params["b1"], 0.0) @ params["w2"] + params["b2"]
    return out, jnp.stack(h_finals, axis=0), jnp.stack(c_finals, axis=0)


if __name__ == "__main__":
    B, T = 2, 8
    input_size, hidden_size, num_layers, fcc_intermediate = 4, 32, 2, 16

    key = jax.random.PRNGKey(0)
    key, kx, kh, kc, kp = jax.random.split(key, 5)
    x = jax.random.normal(kx, (B, T, input_size), dtype=jnp.float32)
    h0 = jax.random.normal(kh, (num_layers, B, hidden_size), dtype=jnp.float32)
    c0 = jax.random.normal(kc, (num_layers, B, hidden_size), dtype=jnp.float32)
    params = init_params(kp, input_size, hidden_size, num_layers, fcc_intermediate)
    packed = pack_params(params, input_size, hidden_size, num_layers, fcc_intermediate)

    out, h_n, c_n = decoder_forward(x, h0, c0, packed)
    jax.block_until_ready((out, h_n, c_n))

    out_ref, h_ref, c_ref = decoder_reference(x, h0, c0, params)
    assert out.shape == (B, 1) and h_n.shape == (num_layers, B, hidden_size)
    assert c_n.shape == (num_layers, B, hidden_size)
    # bf16 MXU operands (f32 accumulation) -> tolerance looser than pure f32.
    assert jnp.allclose(h_n, h_ref, atol=3e-2, rtol=3e-2), "h mismatch"
    assert jnp.allclose(c_n, c_ref, atol=3e-2, rtol=3e-2), "c mismatch"
    assert jnp.allclose(out, out_ref, atol=5e-2, rtol=5e-2), "output mismatch"

    print("KERNEL_OK")
</pallas_src>

<mosaic_0001>
module attributes {stable_mosaic.version = 11 : i64} {
  func.func @_decoder_kernel(%arg0: memref<16x16xf32, #tpu.memory_space<vmem>>, %arg1: memref<4x2x32xf32, #tpu.memory_space<vmem>>, %arg2: memref<80x256xbf16, #tpu.memory_space<vmem>>, %arg3: memref<64x256xf32, #tpu.memory_space<vmem>>, %arg4: memref<8x128xf32, #tpu.memory_space<vmem>>) attributes {dimension_semantics = [], scalar_prefetch = 0 : i64, scratch_operands = 0 : i64, tpu.core_type = #tpu.core_type<tc>} {
    %c0 = arith.constant 0 : index
    %c0_0 = arith.constant 0 : index
    %0 = vector.load %arg0[%c0, %c0_0] : memref<16x16xf32, #tpu.memory_space<vmem>>, vector<16x16xf32>
    %1 = arith.truncf %0 : vector<16x16xf32> to vector<16x16xbf16>
    %c0_1 = arith.constant 0 : index
    %c0_2 = arith.constant 0 : index
    %2 = vector.load %arg2[%c0_1, %c0_2] : memref<80x256xbf16, #tpu.memory_space<vmem>>, vector<16x256xbf16>
    %c16 = arith.constant 16 : index
    %c0_3 = arith.constant 0 : index
    %3 = vector.load %arg2[%c16, %c0_3] : memref<80x256xbf16, #tpu.memory_space<vmem>>, vector<64x256xbf16>
    %c0_4 = arith.constant 0 : index
    %c0_5 = arith.constant 0 : index
    %4 = vector.load %arg3[%c0_4, %c0_5] : memref<64x256xf32, #tpu.memory_space<vmem>>, vector<1x256xf32>
    %5 = vector.shape_cast %4 : vector<1x256xf32> to vector<1x256xf32>
    %6 = vector.broadcast %5 : vector<1x256xf32> to vector<2x256xf32>
    %cst = arith.constant dense<0.000000e+00> : vector<16x256xf32>
    %7 = tpu.matmul %1, %2, %cst {dimension_numbers = #tpu.dot_dimension_numbers<[1], [0], [0], [1], [0, 0, 1, 1], [], []>} : vector<16x16xbf16>, vector<16x256xbf16>, vector<16x256xf32> -> vector<16x256xf32>
    %c0_6 = arith.constant 0 : index
    %c0_7 = arith.constant 0 : index
    %c0_8 = arith.constant 0 : index
    %8 = vector.load %arg1[%c0_6, %c0_7, %c0_8] : memref<4x2x32xf32, #tpu.memory_space<vmem>>, vector<1x2x32xf32>
    %9 = vector.shape_cast %8 : vector<1x2x32xf32> to vector<2x32xf32>
    %c1 = arith.constant 1 : index
    %c0_9 = arith.constant 0 : index
    %c0_10 = arith.constant 0 : index
    %10 = vector.load %arg1[%c1, %c0_9, %c0_10] : memref<4x2x32xf32, #tpu.memory_space<vmem>>, vector<1x2x32xf32>
    %11 = vector.shape_cast %10 : vector<1x2x32xf32> to vector<2x32xf32>
    %c2 = arith.constant 2 : index
    %c0_11 = arith.constant 0 : index
    %c0_12 = arith.constant 0 : index
    %12 = vector.load %arg1[%c2, %c0_11, %c0_12] : memref<4x2x32xf32, #tpu.memory_space<vmem>>, vector<1x2x32xf32>
    %13 = vector.shape_cast %12 : vector<1x2x32xf32> to vector<2x32xf32>
    %c3 = arith.constant 3 : index
    %c0_13 = arith.constant 0 : index
    %c0_14 = arith.constant 0 : index
    %14 = vector.load %arg1[%c3, %c0_13, %c0_14] : memref<4x2x32xf32, #tpu.memory_space<vmem>>, vector<1x2x32xf32>
    %15 = vector.shape_cast %14 : vector<1x2x32xf32> to vector<2x32xf32>
    %16 = tpu.concatenate %9, %11 in 1 : vector<2x32xf32>, vector<2x32xf32> -> vector<2x64xf32>
    %17 = arith.truncf %16 : vector<2x64xf32> to vector<2x64xbf16>
    %cst_15 = arith.constant dense<0.000000e+00> : vector<2x256xf32>
    %18 = tpu.matmul %17, %3, %cst_15 {dimension_numbers = #tpu.dot_dimension_numbers<[1], [0], [0], [1], [0, 0, 1, 1], [], []>} : vector<2x64xbf16>, vector<64x256xbf16>, vector<2x256xf32> -> vector<2x256xf32>
    %19 = arith.addf %18, %6 : vector<2x256xf32>
    %20 = vector.extract_strided_slice %7 {offsets = [0, 0], sizes = [2, 256], strides = [1, 1]} : vector<16x256xf32> to vector<2x256xf32>
    %21 = arith.addf %19, %20 : vector<2x256xf32>
    %22 = arith.negf %21 : vector<2x256xf32>
    %23 = math.exp %22 : vector<2x256xf32>
    %cst_16 = arith.constant 1.000000e+00 : f32
    %24 = vector.broadcast %cst_16 : f32 to vector<2x256xf32>
    %25 = arith.addf %24, %23 : vector<2x256xf32>
    %26 = arith.divf %24, %25 : vector<2x256xf32>
    %27 = math.tanh %21 : vector<2x256xf32>
    %28 = vector.extract_strided_slice %26 {offsets = [0, 0], sizes = [2, 32], strides = [1, 1]} : vector<2x256xf32> to vector<2x32xf32>
    %29 = vector.extract_strided_slice %26 {offsets = [0, 32], sizes = [2, 32], strides = [1, 1]} : vector<2x256xf32> to vector<2x32xf32>
    %30 = vector.extract_strided_slice %27 {offsets = [0, 64], sizes = [2, 32], strides = [1, 1]} : vector<2x256xf32> to vector<2x32xf32>
    %31 = vector.extract_strided_slice %26 {offsets = [0, 96], sizes = [2, 32], strides = [1, 1]} : vector<2x256xf32> to vector<2x32xf32>
    %32 = arith.mulf %29, %13 : vector<2x32xf32>
    %33 = arith.mulf %28, %30 : vector<2x32xf32>
    %34 = arith.addf %32, %33 : vector<2x32xf32>
    %35 = math.tanh %34 : vector<2x32xf32>
    %36 = arith.mulf %31, %35 : vector<2x32xf32>
    %37 = tpu.concatenate %36, %11 in 1 : vector<2x32xf32>, vector<2x32xf32> -> vector<2x64xf32>
    %38 = arith.truncf %37 : vector<2x64xf32> to vector<2x64xbf16>
    %cst_17 = arith.constant dense<0.000000e+00> : vector<2x256xf32>
    %39 = tpu.matmul %38, %3, %cst_17 {dimension_numbers = #tpu.dot_dimension_numbers<[1], [0], [0], [1], [0, 0, 1, 1], [], []>} : vector<2x64xbf16>, vector<64x256xbf16>, vector<2x256xf32> -> vector<2x256xf32>
    %40 = arith.addf %39, %6 : vector<2x256xf32>
    %41 = vector.extract_strided_slice %7 {offsets = [2, 0], sizes = [2, 256], strides = [1, 1]} : vector<16x256xf32> to vector<2x256xf32>
    %42 = arith.addf %40, %41 : vector<2x256xf32>
    %43 = arith.negf %42 : vector<2x256xf32>
    %44 = math.exp %43 : vector<2x256xf32>
    %cst_18 = arith.constant 1.000000e+00 : f32
    %45 = vector.broadcast %cst_18 : f32 to vector<2x256xf32>
    %46 = arith.addf %45, %44 : vector<2x256xf32>
    %47 = arith.divf %45, %46 : vector<2x256xf32>
    %48 = math.tanh %42 : vector<2x256xf32>
    %49 = vector.extract_strided_slice %47 {offsets = [0, 0], sizes = [2, 32], strides = [1, 1]} : vector<2x256xf32> to vector<2x32xf32>
    %50 = vector.extract_strided_slice %47 {offsets = [0, 32], sizes = [2, 32], strides = [1, 1]} : vector<2x256xf32> to vector<2x32xf32>
    %51 = vector.extract_strided_slice %48 {offsets = [0, 64], sizes = [2, 32], strides = [1, 1]} : vector<2x256xf32> to vector<2x32xf32>
    %52 = vector.extract_strided_slice %47 {offsets = [0, 96], sizes = [2, 32], strides = [1, 1]} : vector<2x256xf32> to vector<2x32xf32>
    %53 = arith.mulf %50, %34 : vector<2x32xf32>
    %54 = arith.mulf %49, %51 : vector<2x32xf32>
    %55 = arith.addf %53, %54 : vector<2x32xf32>
    %56 = math.tanh %55 : vector<2x32xf32>
    %57 = arith.mulf %52, %56 : vector<2x32xf32>
    %58 = vector.extract_strided_slice %47 {offsets = [0, 128], sizes = [2, 32], strides = [1, 1]} : vector<2x256xf32> to vector<2x32xf32>
    %59 = vector.extract_strided_slice %47 {offsets = [0, 160], sizes = [2, 32], strides = [1, 1]} : vector<2x256xf32> to vector<2x32xf32>
    %60 = vector.extract_strided_slice %48 {offsets = [0, 192], sizes = [2, 32], strides = [1, 1]} : vector<2x256xf32> to vector<2x32xf32>
    %61 = vector.extract_strided_slice %47 {offsets = [0, 224], sizes = [2, 32], strides = [1, 1]} : vector<2x256xf32> to vector<2x32xf32>
    %62 = arith.mulf %59, %15 : vector<2x32xf32>
    %63 = arith.mulf %58, %60 : vector<2x32xf32>
    %64 = arith.addf %62, %63 : vector<2x32xf32>
    %65 = math.tanh %64 : vector<2x32xf32>
    %66 = arith.mulf %61, %65 : vector<2x32xf32>
    %67 = tpu.concatenate %57, %66 in 1 : vector<2x32xf32>, vector<2x32xf32> -> vector<2x64xf32>
    %68 = arith.truncf %67 : vector<2x64xf32> to vector<2x64xbf16>
    %cst_19 = arith.constant dense<0.000000e+00> : vector<2x256xf32>
    %69 = tpu.matmul %68, %3, %cst_19 {dimension_numbers = #tpu.dot_dimension_numbers<[1], [0], [0], [1], [0, 0, 1, 1], [], []>} : vector<2x64xbf16>, vector<64x256xbf16>, vector<2x256xf32> -> vector<2x256xf32>
    %70 = arith.addf %69, %6 : vector<2x256xf32>
    %71 = vector.extract_strided_slice %7 {offsets = [4, 0], sizes = [2, 256], strides = [1, 1]} : vector<16x256xf32> to vector<2x256xf32>
    %72 = arith.addf %70, %71 : vector<2x256xf32>
    %73 = arith.negf %72 : vector<2x256xf32>
    %74 = math.exp %73 : vector<2x256xf32>
    %cst_20 = arith.constant 1.000000e+00 : f32
    %75 = vector.broadcast %cst_20 : f32 to vector<2x256xf32>
    %76 = arith.addf %75, %74 : vector<2x256xf32>
    %77 = arith.divf %75, %76 : vector<2x256xf32>
    %78 = math.tanh %72 : vector<2x256xf32>
    %79 = vector.extract_strided_slice %77 {offsets = [0, 0], sizes = [2, 32], strides = [1, 1]} : vector<2x256xf32> to vector<2x32xf32>
    %80 = vector.extract_strided_slice %77 {offsets = [0, 32], sizes = [2, 32], strides = [1, 1]} : vector<2x256xf32> to vector<2x32xf32>
    %81 = vector.extract_strided_slice %78 {offsets = [0, 64], sizes = [2, 32], strides = [1, 1]} : vector<2x256xf32> to vector<2x32xf32>
    %82 = vector.extract_strided_slice %77 {offsets = [0, 96], sizes = [2, 32], strides = [1, 1]} : vector<2x256xf32> to vector<2x32xf32>
    %83 = arith.mulf %80, %55 : vector<2x32xf32>
    %84 = arith.mulf %79, %81 : vector<2x32xf32>
    %85 = arith.addf %83, %84 : vector<2x32xf32>
    %86 = math.tanh %85 : vector<2x32xf32>
    %87 = arith.mulf %82, %86 : vector<2x32xf32>
    %88 = vector.extract_strided_slice %77 {offsets = [0, 128], sizes = [2, 32], strides = [1, 1]} : vector<2x256xf32> to vector<2x32xf32>
    %89 = vector.extract_strided_slice %77 {offsets = [0, 160], sizes = [2, 32], strides = [1, 1]} : vector<2x256xf32> to vector<2x32xf32>
    %90 = vector.extract_strided_slice %78 {offsets = [0, 192], sizes = [2, 32], strides = [1, 1]} : vector<2x256xf32> to vector<2x32xf32>
    %91 = vector.extract_strided_slice %77 {offsets = [0, 224], sizes = [2, 32], strides = [1, 1]} : vector<2x256xf32> to vector<2x32xf32>
    %92 = arith.mulf %89, %64 : vector<2x32xf32>
    %93 = arith.mulf %88, %90 : vector<2x32xf32>
    %94 = arith.addf %92, %93 : vector<2x32xf32>
    %95 = math.tanh %94 : vector<2x32xf32>
    %96 = arith.mulf %91, %95 : vector<2x32xf32>
    %97 = tpu.concatenate %87, %96 in 1 : vector<2x32xf32>, vector<2x32xf32> -> vector<2x64xf32>
    %98 = arith.truncf %97 : vector<2x64xf32> to vector<2x64xbf16>
    %cst_21 = arith.constant dense<0.000000e+00> : vector<2x256xf32>
    %99 = tpu.matmul %98, %3, %cst_21 {dimension_numbers = #tpu.dot_dimension_numbers<[1], [0], [0], [1], [0, 0, 1, 1], [], []>} : vector<2x64xbf16>, vector<64x256xbf16>, vector<2x256xf32> -> vector<2x256xf32>
    %100 = arith.addf %99, %6 : vector<2x256xf32>
    %101 = vector.extract_strided_slice %7 {offsets = [6, 0], sizes = [2, 256], strides = [1, 1]} : vector<16x256xf32> to vector<2x256xf32>
    %102 = arith.addf %100, %101 : vector<2x256xf32>
    %103 = arith.negf %102 : vector<2x256xf32>
    %104 = math.exp %103 : vector<2x256xf32>
    %cst_22 = arith.constant 1.000000e+00 : f32
    %105 = vector.broadcast %cst_22 : f32 to vector<2x256xf32>
    %106 = arith.addf %105, %104 : vector<2x256xf32>
    %107 = arith.divf %105, %106 : vector<2x256xf32>
    %108 = math.tanh %102 : vector<2x256xf32>
    %109 = vector.extract_strided_slice %107 {offsets = [0, 0], sizes = [2, 32], strides = [1, 1]} : vector<2x256xf32> to vector<2x32xf32>
    %110 = vector.extract_strided_slice %107 {offsets = [0, 32], sizes = [2, 32], strides = [1, 1]} : vector<2x256xf32> to vector<2x32xf32>
    %111 = vector.extract_strided_slice %108 {offsets = [0, 64], sizes = [2, 32], strides = [1, 1]} : vector<2x256xf32> to vector<2x32xf32>
    %112 = vector.extract_strided_slice %107 {offsets = [0, 96], sizes = [2, 32], strides = [1, 1]} : vector<2x256xf32> to vector<2x32xf32>
    %113 = arith.mulf %110, %85 : vector<2x32xf32>
    %114 = arith.mulf %109, %111 : vector<2x32xf32>
    %115 = arith.addf %113, %114 : vector<2x32xf32>
    %116 = math.tanh %115 : vector<2x32xf32>
    %117 = arith.mulf %112, %116 : vector<2x32xf32>
    %118 = vector.extract_strided_slice %107 {offsets = [0, 128], sizes = [2, 32], strides = [1, 1]} : vector<2x256xf32> to vector<2x32xf32>
    %119 = vector.extract_strided_slice %107 {offsets = [0, 160], sizes = [2, 32], strides = [1, 1]} : vector<2x256xf32> to vector<2x32xf32>
    %120 = vector.extract_strided_slice %108 {offsets = [0, 192], sizes = [2, 32], strides = [1, 1]} : vector<2x256xf32> to vector<2x32xf32>
    %121 = vector.extract_strided_slice %107 {offsets = [0, 224], sizes = [2, 32], strides = [1, 1]} : vector<2x256xf32> to vector<2x32xf32>
    %122 = arith.mulf %119, %94 : vector<2x32xf32>
    %123 = arith.mulf %118, %120 : vector<2x32xf32>
    %124 = arith.addf %122, %123 : vector<2x32xf32>
    %125 = math.tanh %124 : vector<2x32xf32>
    %126 = arith.mulf %121, %125 : vector<2x32xf32>
    %127 = tpu.concatenate %117, %126 in 1 : vector<2x32xf32>, vector<2x32xf32> -> vector<2x64xf32>
    %128 = arith.truncf %127 : vector<2x64xf32> to vector<2x64xbf16>
    %cst_23 = arith.constant dense<0.000000e+00> : vector<2x256xf32>
    %129 = tpu.matmul %128, %3, %cst_23 {dimension_numbers = #tpu.dot_dimension_numbers<[1], [0], [0], [1], [0, 0, 1, 1], [], []>} : vector<2x64xbf16>, vector<64x256xbf16>, vector<2x256xf32> -> vector<2x256xf32>
    %130 = arith.addf %129, %6 : vector<2x256xf32>
    %131 = vector.extract_strided_slice %7 {offsets = [8, 0], sizes = [2, 256], strides = [1, 1]} : vector<16x256xf32> to vector<2x256xf32>
    %132 = arith.addf %130, %131 : vector<2x256xf32>
    %133 = arith.negf %132 : vector<2x256xf32>
    %134 = math.exp %133 : vector<2x256xf32>
    %cst_24 = arith.constant 1.000000e+00 : f32
    %135 = vector.broadcast %cst_24 : f32 to vector<2x256xf32>
    %136 = arith.addf %135, %134 : vector<2x256xf32>
    %137 = arith.divf %135, %136 : vector<2x256xf32>
    %138 = math.tanh %132 : vector<2x256xf32>
    %139 = vector.extract_strided_slice %137 {offsets = [0, 0], sizes = [2, 32], strides = [1, 1]} : vector<2x256xf32> to vector<2x32xf32>
    %140 = vector.extract_strided_slice %137 {offsets = [0, 32], sizes = [2, 32], strides = [1, 1]} : vector<2x256xf32> to vector<2x32xf32>
    %141 = vector.extract_strided_slice %138 {offsets = [0, 64], sizes = [2, 32], strides = [1, 1]} : vector<2x256xf32> to vector<2x32xf32>
    %142 = vector.extract_strided_slice %137 {offsets = [0, 96], sizes = [2, 32], strides = [1, 1]} : vector<2x256xf32> to vector<2x32xf32>
    %143 = arith.mulf %140, %115 : vector<2x32xf32>
    %144 = arith.mulf %139, %141 : vector<2x32xf32>
    %145 = arith.addf %143, %144 : vector<2x32xf32>
    %146 = math.tanh %145 : vector<2x32xf32>
    %147 = arith.mulf %142, %146 : vector<2x32xf32>
    %148 = vector.extract_strided_slice %137 {offsets = [0, 128], sizes = [2, 32], strides = [1, 1]} : vector<2x256xf32> to vector<2x32xf32>
    %149 = vector.extract_strided_slice %137 {offsets = [0, 160], sizes = [2, 32], strides = [1, 1]} : vector<2x256xf32> to vector<2x32xf32>
    %150 = vector.extract_strided_slice %138 {offsets = [0, 192], sizes = [2, 32], strides = [1, 1]} : vector<2x256xf32> to vector<2x32xf32>
    %151 = vector.extract_strided_slice %137 {offsets = [0, 224], sizes = [2, 32], strides = [1, 1]} : vector<2x256xf32> to vector<2x32xf32>
    %152 = arith.mulf %149, %124 : vector<2x32xf32>
    %153 = arith.mulf %148, %150 : vector<2x32xf32>
    %154 = arith.addf %152, %153 : vector<2x32xf32>
    %155 = math.tanh %154 : vector<2x32xf32>
    %156 = arith.mulf %151, %155 : vector<2x32xf32>
    %157 = tpu.concatenate %147, %156 in 1 : vector<2x32xf32>, vector<2x32xf32> -> vector<2x64xf32>
    %158 = arith.truncf %157 : vector<2x64xf32> to vector<2x64xbf16>
    %cst_25 = arith.constant dense<0.000000e+00> : vector<2x256xf32>
    %159 = tpu.matmul %158, %3, %cst_25 {dimension_numbers = #tpu.dot_dimension_numbers<[1], [0], [0], [1], [0, 0, 1, 1], [], []>} : vector<2x64xbf16>, vector<64x256xbf16>, vector<2x256xf32> -> vector<2x256xf32>
    %160 = arith.addf %159, %6 : vector<2x256xf32>
    %161 = vector.extract_strided_slice %7 {offsets = [10, 0], sizes = [2, 256], strides = [1, 1]} : vector<16x256xf32> to vector<2x256xf32>
    %162 = arith.addf %160, %161 : vector<2x256xf32>
    %163 = arith.negf %162 : vector<2x256xf32>
    %164 = math.exp %163 : vector<2x256xf32>
    %cst_26 = arith.constant 1.000000e+00 : f32
    %165 = vector.broadcast %cst_26 : f32 to vector<2x256xf32>
    %166 = arith.addf %165, %164 : vector<2x256xf32>
    %167 = arith.divf %165, %166 : vector<2x256xf32>
    %168 = math.tanh %162 : vector<2x256xf32>
    %169 = vector.extract_strided_slice %167 {offsets = [0, 0], sizes = [2, 32], strides = [1, 1]} : vector<2x256xf32> to vector<2x32xf32>
    %170 = vector.extract_strided_slice %167 {offsets = [0, 32], sizes = [2, 32], strides = [1, 1]} : vector<2x256xf32> to vector<2x32xf32>
    %171 = vector.extract_strided_slice %168 {offsets = [0, 64], sizes = [2, 32], strides = [1, 1]} : vector<2x256xf32> to vector<2x32xf32>
    %172 = vector.extract_strided_slice %167 {offsets = [0, 96], sizes = [2, 32], strides = [1, 1]} : vector<2x256xf32> to vector<2x32xf32>
    %173 = arith.mulf %170, %145 : vector<2x32xf32>
    %174 = arith.mulf %169, %171 : vector<2x32xf32>
    %175 = arith.addf %173, %174 : vector<2x32xf32>
    %176 = math.tanh %175 : vector<2x32xf32>
    %177 = arith.mulf %172, %176 : vector<2x32xf32>
    %178 = vector.extract_strided_slice %167 {offsets = [0, 128], sizes = [2, 32], strides = [1, 1]} : vector<2x256xf32> to vector<2x32xf32>
    %179 = vector.extract_strided_slice %167 {offsets = [0, 160], sizes = [2, 32], strides = [1, 1]} : vector<2x256xf32> to vector<2x32xf32>
    %180 = vector.extract_strided_slice %168 {offsets = [0, 192], sizes = [2, 32], strides = [1, 1]} : vector<2x256xf32> to vector<2x32xf32>
    %181 = vector.extract_strided_slice %167 {offsets = [0, 224], sizes = [2, 32], strides = [1, 1]} : vector<2x256xf32> to vector<2x32xf32>
    %182 = arith.mulf %179, %154 : vector<2x32xf32>
    %183 = arith.mulf %178, %180 : vector<2x32xf32>
    %184 = arith.addf %182, %183 : vector<2x32xf32>
    %185 = math.tanh %184 : vector<2x32xf32>
    %186 = arith.mulf %181, %185 : vector<2x32xf32>
    %187 = tpu.concatenate %177, %186 in 1 : vector<2x32xf32>, vector<2x32xf32> -> vector<2x64xf32>
    %188 = arith.truncf %187 : vector<2x64xf32> to vector<2x64xbf16>
    %cst_27 = arith.constant dense<0.000000e+00> : vector<2x256xf32>
    %189 = tpu.matmul %188, %3, %cst_27 {dimension_numbers = #tpu.dot_dimension_numbers<[1], [0], [0], [1], [0, 0, 1, 1], [], []>} : vector<2x64xbf16>, vector<64x256xbf16>, vector<2x256xf32> -> vector<2x256xf32>
    %190 = arith.addf %189, %6 : vector<2x256xf32>
    %191 = vector.extract_strided_slice %7 {offsets = [12, 0], sizes = [2, 256], strides = [1, 1]} : vector<16x256xf32> to vector<2x256xf32>
    %192 = arith.addf %190, %191 : vector<2x256xf32>
    %193 = arith.negf %192 : vector<2x256xf32>
    %194 = math.exp %193 : vector<2x256xf32>
    %cst_28 = arith.constant 1.000000e+00 : f32
    %195 = vector.broadcast %cst_28 : f32 to vector<2x256xf32>
    %196 = arith.addf %195, %194 : vector<2x256xf32>
    %197 = arith.divf %195, %196 : vector<2x256xf32>
    %198 = math.tanh %192 : vector<2x256xf32>
    %199 = vector.extract_strided_slice %197 {offsets = [0, 0], sizes = [2, 32], strides = [1, 1]} : vector<2x256xf32> to vector<2x32xf32>
    %200 = vector.extract_strided_slice %197 {offsets = [0, 32], sizes = [2, 32], strides = [1, 1]} : vector<2x256xf32> to vector<2x32xf32>
    %201 = vector.extract_strided_slice %198 {offsets = [0, 64], sizes = [2, 32], strides = [1, 1]} : vector<2x256xf32> to vector<2x32xf32>
    %202 = vector.extract_strided_slice %197 {offsets = [0, 96], sizes = [2, 32], strides = [1, 1]} : vector<2x256xf32> to vector<2x32xf32>
    %203 = arith.mulf %200, %175 : vector<2x32xf32>
    %204 = arith.mulf %199, %201 : vector<2x32xf32>
    %205 = arith.addf %203, %204 : vector<2x32xf32>
    %206 = math.tanh %205 : vector<2x32xf32>
    %207 = arith.mulf %202, %206 : vector<2x32xf32>
    %208 = vector.extract_strided_slice %197 {offsets = [0, 128], sizes = [2, 32], strides = [1, 1]} : vector<2x256xf32> to vector<2x32xf32>
    %209 = vector.extract_strided_slice %197 {offsets = [0, 160], sizes = [2, 32], strides = [1, 1]} : vector<2x256xf32> to vector<2x32xf32>
    %210 = vector.extract_strided_slice %198 {offsets = [0, 192], sizes = [2, 32], strides = [1, 1]} : vector<2x256xf32> to vector<2x32xf32>
    %211 = vector.extract_strided_slice %197 {offsets = [0, 224], sizes = [2, 32], strides = [1, 1]} : vector<2x256xf32> to vector<2x32xf32>
    %212 = arith.mulf %209, %184 : vector<2x32xf32>
    %213 = arith.mulf %208, %210 : vector<2x32xf32>
    %214 = arith.addf %212, %213 : vector<2x32xf32>
    %215 = math.tanh %214 : vector<2x32xf32>
    %216 = arith.mulf %211, %215 : vector<2x32xf32>
    %217 = tpu.concatenate %207, %216 in 1 : vector<2x32xf32>, vector<2x32xf32> -> vector<2x64xf32>
    %218 = arith.truncf %217 : vector<2x64xf32> to vector<2x64xbf16>
    %cst_29 = arith.constant dense<0.000000e+00> : vector<2x256xf32>
    %219 = tpu.matmul %218, %3, %cst_29 {dimension_numbers = #tpu.dot_dimension_numbers<[1], [0], [0], [1], [0, 0, 1, 1], [], []>} : vector<2x64xbf16>, vector<64x256xbf16>, vector<2x256xf32> -> vector<2x256xf32>
    %220 = arith.addf %219, %6 : vector<2x256xf32>
    %221 = vector.extract_strided_slice %7 {offsets = [14, 0], sizes = [2, 256], strides = [1, 1]} : vector<16x256xf32> to vector<2x256xf32>
    %222 = arith.addf %220, %221 : vector<2x256xf32>
    %223 = arith.negf %222 : vector<2x256xf32>
    %224 = math.exp %223 : vector<2x256xf32>
    %cst_30 = arith.constant 1.000000e+00 : f32
    %225 = vector.broadcast %cst_30 : f32 to vector<2x256xf32>
    %226 = arith.addf %225, %224 : vector<2x256xf32>
    %227 = arith.divf %225, %226 : vector<2x256xf32>
    %228 = math.tanh %222 : vector<2x256xf32>
    %229 = vector.extract_strided_slice %227 {offsets = [0, 0], sizes = [2, 32], strides = [1, 1]} : vector<2x256xf32> to vector<2x32xf32>
    %230 = vector.extract_strided_slice %227 {offsets = [0, 32], sizes = [2, 32], strides = [1, 1]} : vector<2x256xf32> to vector<2x32xf32>
    %231 = vector.extract_strided_slice %228 {offsets = [0, 64], sizes = [2, 32], strides = [1, 1]} : vector<2x256xf32> to vector<2x32xf32>
    %232 = vector.extract_strided_slice %227 {offsets = [0, 96], sizes = [2, 32], strides = [1, 1]} : vector<2x256xf32> to vector<2x32xf32>
    %233 = arith.mulf %230, %205 : vector<2x32xf32>
    %234 = arith.mulf %229, %231 : vector<2x32xf32>
    %235 = arith.addf %233, %234 : vector<2x32xf32>
    %236 = math.tanh %235 : vector<2x32xf32>
    %237 = arith.mulf %232, %236 : vector<2x32xf32>
    %238 = vector.extract_strided_slice %227 {offsets = [0, 128], sizes = [2, 32], strides = [1, 1]} : vector<2x256xf32> to vector<2x32xf32>
    %239 = vector.extract_strided_slice %227 {offsets = [0, 160], sizes = [2, 32], strides = [1, 1]} : vector<2x256xf32> to vector<2x32xf32>
    %240 = vector.extract_strided_slice %228 {offsets = [0, 192], sizes = [2, 32], strides = [1, 1]} : vector<2x256xf32> to vector<2x32xf32>
    %241 = vector.extract_strided_slice %227 {offsets = [0, 224], sizes = [2, 32], strides = [1, 1]} : vector<2x256xf32> to vector<2x32xf32>
    %242 = arith.mulf %239, %214 : vector<2x32xf32>
    %243 = arith.mulf %238, %240 : vector<2x32xf32>
    %244 = arith.addf %242, %243 : vector<2x32xf32>
    %245 = math.tanh %244 : vector<2x32xf32>
    %246 = arith.mulf %241, %245 : vector<2x32xf32>
    %247 = tpu.concatenate %237, %246 in 1 : vector<2x32xf32>, vector<2x32xf32> -> vector<2x64xf32>
    %248 = arith.truncf %247 : vector<2x64xf32> to vector<2x64xbf16>
    %cst_31 = arith.constant dense<0.000000e+00> : vector<2x256xf32>
    %249 = tpu.matmul %248, %3, %cst_31 {dimension_numbers = #tpu.dot_dimension_numbers<[1], [0], [0], [1], [0, 0, 1, 1], [], []>} : vector<2x64xbf16>, vector<64x256xbf16>, vector<2x256xf32> -> vector<2x256xf32>
    %250 = arith.addf %249, %6 : vector<2x256xf32>
    %251 = arith.negf %250 : vector<2x256xf32>
    %252 = math.exp %251 : vector<2x256xf32>
    %cst_32 = arith.constant 1.000000e+00 : f32
    %253 = vector.broadcast %cst_32 : f32 to vector<2x256xf32>
    %254 = arith.addf %253, %252 : vector<2x256xf32>
    %255 = arith.divf %253, %254 : vector<2x256xf32>
    %256 = math.tanh %250 : vector<2x256xf32>
    %257 = vector.extract_strided_slice %255 {offsets = [0, 128], sizes = [2, 32], strides = [1, 1]} : vector<2x256xf32> to vector<2x32xf32>
    %258 = vector.extract_strided_slice %255 {offsets = [0, 160], sizes = [2, 32], strides = [1, 1]} : vector<2x256xf32> to vector<2x32xf32>
    %259 = vector.extract_strided_slice %256 {offsets = [0, 192], sizes = [2, 32], strides = [1, 1]} : vector<2x256xf32> to vector<2x32xf32>
    %260 = vector.extract_strided_slice %255 {offsets = [0, 224], sizes = [2, 32], strides = [1, 1]} : vector<2x256xf32> to vector<2x32xf32>
    %261 = arith.mulf %258, %244 : vector<2x32xf32>
    %262 = arith.mulf %257, %259 : vector<2x32xf32>
    %263 = arith.addf %261, %262 : vector<2x32xf32>
    %264 = math.tanh %263 : vector<2x32xf32>
    %265 = arith.mulf %260, %264 : vector<2x32xf32>
    %c8 = arith.constant 8 : index
    %c0_33 = arith.constant 0 : index
    %266 = vector.load %arg3[%c8, %c0_33] : memref<64x256xf32, #tpu.memory_space<vmem>>, vector<32x16xf32>
    %c40 = arith.constant 40 : index
    %c0_34 = arith.constant 0 : index
    %267 = vector.load %arg3[%c40, %c0_34] : memref<64x256xf32, #tpu.memory_space<vmem>>, vector<16x1xf32>
    %c56 = arith.constant 56 : index
    %c0_35 = arith.constant 0 : index
    %268 = vector.load %arg3[%c56, %c0_35] : memref<64x256xf32, #tpu.memory_space<vmem>>, vector<1x17xf32>
    %269 = vector.extract_strided_slice %268 {offsets = [0, 0], sizes = [1, 16], strides = [1, 1]} : vector<1x17xf32> to vector<1x16xf32>
    %270 = vector.extract_strided_slice %268 {offsets = [0, 16], sizes = [1, 1], strides = [1, 1]} : vector<1x17xf32> to vector<1x1xf32>
    %cst_36 = arith.constant dense<0.000000e+00> : vector<2x16xf32>
    %271 = tpu.matmul %265, %266, %cst_36 {dimension_numbers = #tpu.dot_dimension_numbers<[1], [0], [0], [1], [0, 0, 1, 1], [], []>} : vector<2x32xf32>, vector<32x16xf32>, vector<2x16xf32> -> vector<2x16xf32>
    %272 = vector.broadcast %269 : vector<1x16xf32> to vector<2x16xf32>
    %273 = arith.addf %271, %272 : vector<2x16xf32>
    %cst_37 = arith.constant 0.000000e+00 : f32
    %274 = vector.broadcast %cst_37 : f32 to vector<2x16xf32>
    %275 = arith.maximumf %273, %274 : vector<2x16xf32>
    %cst_38 = arith.constant dense<0.000000e+00> : vector<2x1xf32>
    %276 = tpu.matmul %275, %267, %cst_38 {dimension_numbers = #tpu.dot_dimension_numbers<[1], [0], [0], [1], [0, 0, 1, 1], [], []>} : vector<2x16xf32>, vector<16x1xf32>, vector<2x1xf32> -> vector<2x1xf32>
    %277 = vector.broadcast %270 : vector<1x1xf32> to vector<2x1xf32>
    %278 = arith.addf %276, %277 : vector<2x1xf32>
    %cst_39 = arith.constant 0.000000e+00 : f32
    %279 = vector.broadcast %cst_39 : f32 to vector<8x128xf32>
    %c0_40 = arith.constant 0 : index
    %c0_41 = arith.constant 0 : index
    %280 = vector.load %arg4[%c0_40, %c0_41] : memref<8x128xf32, #tpu.memory_space<vmem>>, vector<8x128xf32>
    tpu.vector_store %arg4[%c0_40, %c0_41], %279 {strides = array<i32>} : memref<8x128xf32, #tpu.memory_space<vmem>>, vector<8x128xf32>,
    %c0_42 = arith.constant 0 : index
    %c0_43 = arith.constant 0 : index
    %281 = vector.load %arg4[%c0_42, %c0_43] : memref<8x128xf32, #tpu.memory_space<vmem>>, vector<2x32xf32>
    tpu.vector_store %arg4[%c0_42, %c0_43], %237 {strides = array<i32>} : memref<8x128xf32, #tpu.memory_space<vmem>>, vector<2x32xf32>,
    %c4 = arith.constant 4 : index
    %c0_44 = arith.constant 0 : index
    %282 = vector.load %arg4[%c4, %c0_44] : memref<8x128xf32, #tpu.memory_space<vmem>>, vector<2x32xf32>
    tpu.vector_store %arg4[%c4, %c0_44], %235 {strides = array<i32>} : memref<8x128xf32, #tpu.memory_space<vmem>>, vector<2x32xf32>,
    %c2_45 = arith.constant 2 : index
    %c0_46 = arith.constant 0 : index
    %283 = vector.load %arg4[%c2_45, %c0_46] : memref<8x128xf32, #tpu.memory_space<vmem>>, vector<2x32xf32>
    tpu.vector_store %arg4[%c2_45, %c0_46], %265 {strides = array<i32>} : memref<8x128xf32, #tpu.memory_space<vmem>>, vector<2x32xf32>,
    %c6 = arith.constant 6 : index
    %c0_47 = arith.constant 0 : index
    %284 = vector.load %arg4[%c6, %c0_47] : memref<8x128xf32, #tpu.memory_space<vmem>>, vector<2x32xf32>
    tpu.vector_store %arg4[%c6, %c0_47], %263 {strides = array<i32>} : memref<8x128xf32, #tpu.memory_space<vmem>>, vector<2x32xf32>,
    %c0_48 = arith.constant 0 : index
    %c32 = arith.constant 32 : index
    %285 = vector.load %arg4[%c0_48, %c32] : memref<8x128xf32, #tpu.memory_space<vmem>>, vector<2x1xf32>
    tpu.vector_store %arg4[%c0_48, %c32], %278 {strides = array<i32>} : memref<8x128xf32, #tpu.memory_space<vmem>>, vector<2x1xf32>,
    return
  }
}

</mosaic_0001>

<llo_original>
// kernel: tpu_custom_call.1
$region0: #{tpu_custom_call.1}
  #allocation0 [shape = 'u32[]', space=smem, size = 0x4, offset = 0x4, fixed_abs, tag = 'smem constant byte address 0x4 - core index']
  #allocation1 [shape = 'u32[144,128]{1,0:T(1,128)}', space=vmem, size = 0x12000, scoped, tag = 'internal scratch']
  %s0 = inlined_call_operand.hbm [shape: f32[16,16], index: 0, kind: input, shape index: {}]
  %s1 = inlined_call_operand.hbm [shape: f32[4,2,32], index: 1, kind: input, shape index: {}]
  %s2 = inlined_call_operand.hbm [shape: bf16[80,256], index: 2, kind: input, shape index: {}]
  %s3 = inlined_call_operand.hbm [shape: f32[64,256], index: 3, kind: input, shape index: {}]
  %s4 = inlined_call_operand.hbm [shape: f32[8,128], index: 4, kind: output, shape index: {}]
  %s5 = sld [smem:[#allocation0]]
  $region42: #{tpu_custom_call.1} parent=0
    _
  %s7 = ssub.s32 1, %s5
  %s8 = scalar_select 0, %s7, %s5
  $region1: #{tpu_custom_call.1} parent=0
    #allocation2 [shape = 'u8[8192]{0}', space=vmem, size = 0x2000, scoped, tag = 'input window, operand 0, single buffered']
    #allocation3 [shape = 's32[1]{0}', space=sflag, size = 0x4, scoped, tag = 'scoped memory for tpu_custom_call.1']
    #allocation4 [shape = 's32[1]{0}', space=sflag, size = 0x4, scoped, tag = 'scoped memory for tpu_custom_call.1']
    #allocation5 [shape = 'u8[4096]{0}', space=vmem, size = 0x1000, scoped, tag = 'input window, operand 1, single buffered']
    #allocation6 [shape = 's32[1]{0}', space=sflag, size = 0x4, scoped, tag = 'scoped memory for tpu_custom_call.1']
    #allocation7 [shape = 'u8[40960]{0}', space=vmem, size = 0xa000, scoped, tag = 'input window, operand 2, single buffered']
    #allocation8 [shape = 'u8[65536]{0}', space=vmem, size = 0x10000, scoped, tag = 'input window, operand 3, single buffered']
    #allocation9 [shape = 's32[1]{0}', space=sflag, size = 0x4, scoped, tag = 'scoped memory for tpu_custom_call.1']
    #allocation10 [shape = 'u8[4096]{0}', space=vmem, size = 0x1000, scoped, tag = 'output window, operand 0, single buffered']
    %9 = vsyncpa [#allocation3], 0
    %10 = vsyncpa [#allocation6], 0
    %11 = vsyncpa [#allocation9], 0
    %12 = vsyncpa [#allocation4], 0
    // Predicated region
    $region2: #{tpu_custom_call.1} parent=1 // pred_check
      _
    $region3: #{tpu_custom_call.1} parent=1 // pred_check_branch
      %14 = sbr.rel (0) target = $region5
    $region4: #{tpu_custom_call.1} parent=1 // pred_region
      %s16 = ssub.s32 256, 256
      %17 = vsyncadd [#allocation3], %s16
      %s18 = sshll.u32 [#allocation2], 4
      %s19 = int_to_ptr.vmem [resolvable:$true] %s18
      %24 = dma.hbm_to_vmem [thread:$0]  %s0, 256, %s19, [#allocation3], 128, 128, 8
    $region5: #{tpu_custom_call.1} parent=1 // pred_fallthru
      _
    // Predicated region
    $region6: #{tpu_custom_call.1} parent=1 // pred_check
      _
    $region7: #{tpu_custom_call.1} parent=1 // pred_check_branch
      %26 = sbr.rel (0) target = $region9
    $region8: #{tpu_custom_call.1} parent=1 // pred_region
      %s28 = ssub.s32 128, 128
      %29 = vsyncadd [#allocation6], %s28
      %s30 = sshll.u32 [#allocation5], 4
      %s31 = int_to_ptr.vmem [resolvable:$true] %s30
      %36 = dma.hbm_to_vmem [thread:$0]  %s1, 128, %s31, [#allocation6], 32, 32, 2
    $region9: #{tpu_custom_call.1} parent=1 // pred_fallthru
      _
    // Predicated region
    $region10: #{tpu_custom_call.1} parent=1 // pred_check
      _
    $region11: #{tpu_custom_call.1} parent=1 // pred_check_branch
      %38 = sbr.rel (0) target = $region13
    $region12: #{tpu_custom_call.1} parent=1 // pred_region
      %s40 = ssub.s32 1280, 1280
      %41 = vsyncadd [#allocation6], %s40
      %s42 = sshll.u32 [#allocation7], 4
      %s43 = int_to_ptr.vmem [resolvable:$true] %s42
      %48 = dma.hbm_to_vmem [thread:$0]  %s2, 1280, %s43, [#allocation6], 128, 128, 8
    $region13: #{tpu_custom_call.1} parent=1 // pred_fallthru
      _
    // Predicated region
    $region14: #{tpu_custom_call.1} parent=1 // pred_check
      _
    $region15: #{tpu_custom_call.1} parent=1 // pred_check_branch
      %50 = sbr.rel (0) target = $region17
    $region16: #{tpu_custom_call.1} parent=1 // pred_region
      %s52 = ssub.s32 2048, 2048
      %53 = vsyncadd [#allocation9], %s52
      %s54 = sshll.u32 [#allocation8], 4
      %s55 = int_to_ptr.vmem [resolvable:$true] %s54
      %60 = dma.hbm_to_vmem [thread:$0]  %s3, 2048, %s55, [#allocation9], 256, 256, 16
    $region17: #{tpu_custom_call.1} parent=1 // pred_fallthru
      _
    // Predicated region
    $region18: #{tpu_custom_call.1} parent=1 // pred_check
      _
    $region19: #{tpu_custom_call.1} parent=1 // pred_check_branch
      %62 = sbr.rel (0) target = $region21
    $region20: #{tpu_custom_call.1} parent=1 // pred_region
      %63 = dma.done [#allocation3], 256
    $region21: #{tpu_custom_call.1} parent=1 // pred_fallthru
      _
    // Predicated region
    $region22: #{tpu_custom_call.1} parent=1 // pred_check
      _
    $region23: #{tpu_custom_call.1} parent=1 // pred_check_branch
      %65 = sbr.rel (0) target = $region25
    $region24: #{tpu_custom_call.1} parent=1 // pred_region
      %66 = dma.done [#allocation6], 128
    $region25: #{tpu_custom_call.1} parent=1 // pred_fallthru
      _
    // Predicated region
    $region26: #{tpu_custom_call.1} parent=1 // pred_check
      _
    $region27: #{tpu_custom_call.1} parent=1 // pred_check_branch
      %68 = sbr.rel (0) target = $region29
    $region28: #{tpu_custom_call.1} parent=1 // pred_region
      %69 = dma.done [#allocation6], 1280
    $region29: #{tpu_custom_call.1} parent=1 // pred_fallthru
      _
    // Predicated region
    $region30: #{tpu_custom_call.1} parent=1 // pred_check
      _
    $region31: #{tpu_custom_call.1} parent=1 // pred_check_branch
      %71 = sbr.rel (0) target = $region33
    $region32: #{tpu_custom_call.1} parent=1 // pred_region
      %72 = dma.done [#allocation9], 2048
    $region33: #{tpu_custom_call.1} parent=1 // pred_fallthru
      _
    %v74 = vld [vmem:[#allocation2] sm:$0xff]
    %v75 = vld [vmem:[#allocation2 + $0x8] sm:$0xff]
    %v76 = vpack.c.bf16 %v75, %v74
    %v77 = vld [vmem:[#allocation7] sm:$0xff]
    %v78 = vld [vmem:[#allocation7 + $0x8] sm:$0xff]
    %v79 = vld [vmem:[#allocation7 + $0x10] sm:$0xff]
    %v80 = vld [vmem:[#allocation7 + $0x18] sm:$0xff]
    %v81 = vld [vmem:[#allocation7 + $0x20] sm:$0xff]
    %v82 = vld [vmem:[#allocation7 + $0x28] sm:$0xff]
    %v83 = vld [vmem:[#allocation7 + $0x30] sm:$0xff]
    %v84 = vld [vmem:[#allocation7 + $0x38] sm:$0xff]
    %v85 = vld [vmem:[#allocation7 + $0x40] sm:$0xff]
    %v86 = vld [vmem:[#allocation7 + $0x48] sm:$0xff]
    %v87 = vld [vmem:[#allocation8] ss:$8 sm:$0x3]
    %v89 = vlaneseq
    %v90 = vshrl.u32 %v89, 7
    %v91 = vsub.s32 0, %v90
    %v92 = vrot.slane %v87, %v91
    %v93 = vlaneseq
    %v94 = vshrl.u32 %v93, 7
    %v95 = vsub.s32 1, %v94
    %v96 = vrot.slane %v87, %v95
    %v101 = vunpack.c.l.b16 %v77
    %v102 = vunpack.c.h.b16 %v77
    %v103 = vunpack.c.l.b16 %v78
    %v104 = vunpack.c.h.b16 %v78
    %v105 = vpack.c.b16 %v103, %v101
    %v106 = vpack.c.b16 %v104, %v102
    %vm109 = vcmask 130048
    %v111 = vsel %vm109, %v76, 0
    %113 = vmatprep.subr.bf16.mxu0 0
    %114 = vmatpush1.bf16.msra.mxu0 0
    %115 = vmatprep.subr.bf16.mxu0 0
    %116 = vmatpush1.bf16.msra.mxu0 0
    %117 = vmatprep.subr.bf16.mxu0 0
    %118 = vmatpush1.bf16.msra.mxu0 0
    %119 = vmatprep.subr.bf16.mxu0 0
    %120 = vmatpush1.bf16.msra.mxu0 0
    %121 = vmatprep.subr.bf16.mxu0 0
    %122 = vmatpush1.bf16.msra.mxu0 0
    %123 = vmatprep.subr.bf16.mxu0 0
    %124 = vmatpush1.bf16.msra.mxu0 0
    %125 = vmatprep.subr.bf16.mxu0 0
    %126 = vmatpush1.bf16.msra.mxu0 0
    %127 = vmatprep.subr.bf16.mxu0 %v106
    %128 = vmatpush1.bf16.msra.mxu0 %v105
    %129 = vmatprep.subr.bf16.mxu0 0
    %130 = vmatpush2.bf16.msra.mxu0 0
    %131 = vmatprep.subr.bf16.mxu0 0
    %132 = vmatpush2.bf16.msra.mxu0 0
    %133 = vmatprep.subr.bf16.mxu0 0
    %134 = vmatpush2.bf16.msra.mxu0 0
    %135 = vmatprep.subr.bf16.mxu0 0
    %136 = vmatpush2.bf16.msra.mxu0 0
    %137 = vmatprep.subr.bf16.mxu0 0
    %138 = vmatpush2.bf16.msra.mxu0 0
    %139 = vmatprep.subr.bf16.mxu0 0
    %140 = vmatpush2.bf16.msra.mxu0 0
    %141 = vmatprep.subr.bf16.mxu0 0
    %142 = vmatpush2.bf16.msra.mxu0 0
    %143 = vmatprep.subr.bf16.mxu0 0
    %144 = vmatpush2.bf16.msra.mxu0 0
    %145 = vmatprep.mubr.bf16.mxu0 0
    %146 = vmatmul.mubr.bf16.gmra.mxu0 %v111
    %v147 = vpop.f32.mrf.mxu0
    %v148 = vadd.f32 0.0, %v147
    %v149 = vpop.f32.mrf.mxu0
    %v150 = vadd.f32 0.0, %v149
    %v151 = vpop.f32.mrf.mxu0
    %v152 = vadd.f32 0.0, %v151
    %v153 = vpop.f32.mrf.mxu0
    %v154 = vadd.f32 0.0, %v153
    %155 = vdwg.mxu0
    %v156 = vld [vmem:[#allocation5] sm:$0x3]
    %s157 = scalar_lea.vmem [#allocation5], 2
    %v158 = vld [vmem:[%s157] sm:$0x3]
    %s159 = scalar_lea.vmem [#allocation5], 4
    %v160 = vld [vmem:[%s159] sm:$0x3]
    %s161 = scalar_lea.vmem [#allocation5], 6
    %v162 = vld [vmem:[%s161] sm:$0x3]
    %164 = vrot.lane.b32.xlu0 %v158, 32
    %v165 = vpop.permute.xlu0 %164
    %vm167 = vcmask 261120
    %v168 = vsel %vm167, %v156, %v165
    %v169 = vpack.c.bf16 %v168, %v168
    %v178 = vunpack.c.l.b16 %v79
    %v179 = vunpack.c.h.b16 %v79
    %v180 = vunpack.c.l.b16 %v80
    %v181 = vunpack.c.h.b16 %v80
    %v182 = vunpack.c.l.b16 %v81
    %v183 = vunpack.c.h.b16 %v81
    %v184 = vunpack.c.l.b16 %v82
    %v185 = vunpack.c.h.b16 %v82
    %v186 = vunpack.c.l.b16 %v83
    %v187 = vunpack.c.h.b16 %v83
    %v188 = vunpack.c.l.b16 %v84
    %v189 = vunpack.c.h.b16 %v84
    %v190 = vunpack.c.l.b16 %v85
    %v191 = vunpack.c.h.b16 %v85
    %v192 = vunpack.c.l.b16 %v86
    %v193 = vunpack.c.h.b16 %v86
    %v194 = vpack.c.b16 %v180, %v178
    %v195 = vpack.c.b16 %v181, %v179
    %v196 = vpack.c.b16 %v184, %v182
    %v197 = vpack.c.b16 %v185, %v183
    %v198 = vpack.c.b16 %v188, %v186
    %v199 = vpack.c.b16 %v189, %v187
    %v200 = vpack.c.b16 %v192, %v190
    %v201 = vpack.c.b16 %v193, %v191
    %vm210 = vcmask 523264
    %v212 = vsel %vm210, %v169, 0
    %214 = vmatprep.subr.bf16.mxu0 0
    %215 = vmatpush1.bf16.msra.mxu0 0
    %216 = vmatprep.subr.bf16.mxu0 0
    %217 = vmatpush1.bf16.msra.mxu0 0
    %218 = vmatprep.subr.bf16.mxu0 0
    %219 = vmatpush1.bf16.msra.mxu0 0
    %220 = vmatprep.subr.bf16.mxu0 0
    %221 = vmatpush1.bf16.msra.mxu0 0
    %222 = vmatprep.subr.bf16.mxu0 %v201
    %223 = vmatpush1.bf16.msra.mxu0 %v200
    %224 = vmatprep.subr.bf16.mxu0 %v199
    %225 = vmatpush1.bf16.msra.mxu0 %v198
    %226 = vmatprep.subr.bf16.mxu0 %v197
    %227 = vmatpush1.bf16.msra.mxu0 %v196
    %228 = vmatprep.subr.bf16.mxu0 %v195
    %229 = vmatpush1.bf16.msra.mxu0 %v194
    %230 = vmatprep.subr.bf16.mxu0 0
    %231 = vmatpush2.bf16.msra.mxu0 0
    %232 = vmatprep.subr.bf16.mxu0 0
    %233 = vmatpush2.bf16.msra.mxu0 0
    %234 = vmatprep.subr.bf16.mxu0 0
    %235 = vmatpush2.bf16.msra.mxu0 0
    %236 = vmatprep.subr.bf16.mxu0 0
    %237 = vmatpush2.bf16.msra.mxu0 0
    %238 = vmatprep.subr.bf16.mxu0 0
    %239 = vmatpush2.bf16.msra.mxu0 0
    %240 = vmatprep.subr.bf16.mxu0 0
    %241 = vmatpush2.bf16.msra.mxu0 0
    %242 = vmatprep.subr.bf16.mxu0 0
    %243 = vmatpush2.bf16.msra.mxu0 0
    %244 = vmatprep.subr.bf16.mxu0 0
    %245 = vmatpush2.bf16.msra.mxu0 0
    %246 = vmatprep.mubr.bf16.mxu0 0
    %247 = vmatmul.mubr.bf16.gmra.mxu0 %v212
    %v248 = vpop.f32.mrf.mxu0
    %v249 = vadd.f32 %v92, %v248
    %v250 = vpop.f32.mrf.mxu0
    %v251 = vpop.f32.mrf.mxu0
    %v252 = vpop.f32.mrf.mxu0
    %253 = vdwg.mxu0
    %v254 = vadd.f32 %v249, %v148
    %v255 = vxor.u32 %v254, 2147483648
    %v256 = vmul.f32 %v255, 1.442695
    %v257 = vpow.pop %v256
    %v258 = vadd.f32 %v257, 1.0
    %v259 = vrcp.pop %v258
    %v260 = vmul.f32 1.0, %v259
    %v261 = vtanh.pop %v254
    %263 = vrot.lane.b32.xlu0 %v160, 32
    %v264 = vpop.permute.xlu0 %263
    %v266 = vmul.f32 %v260, %v264
    %268 = vrot.lane.b32.xlu0 %v261, 64
    %v269 = vpop.permute.xlu0 %268
    %v271 = vmul.f32 %v260, %v269
    %273 = vrot.lane.b32.xlu0 %v271, 32
    %v274 = vpop.permute.xlu0 %273
    %v276 = vadd.f32 %v266, %v274
    %v277 = vtanh.pop %v276
    %279 = vrot.lane.b32.xlu0 %v277, 64
    %v280 = vpop.permute.xlu0 %279
    %v282 = vmul.f32 %v260, %v280
    %284 = vrot.lane.b32.xlu0 %v282, 32
    %v285 = vpop.permute.xlu0 %284
    %v287 = vsel %vm167, %v285, %v165
    %v288 = vpack.c.bf16 %v287, %v287
    %v290 = vsel %vm210, %v288, 0
    %292 = vmatprep.subr.bf16.mxu0 0
    %293 = vmatpush1.bf16.msra.mxu0 0
    %294 = vmatprep.subr.bf16.mxu0 0
    %295 = vmatpush1.bf16.msra.mxu0 0
    %296 = vmatprep.subr.bf16.mxu0 0
    %297 = vmatpush1.bf16.msra.mxu0 0
    %298 = vmatprep.subr.bf16.mxu0 0
    %299 = vmatpush1.bf16.msra.mxu0 0
    %300 = vmatprep.subr.bf16.mxu0 %v201
    %301 = vmatpush1.bf16.msra.mxu0 %v200
    %302 = vmatprep.subr.bf16.mxu0 %v199
    %303 = vmatpush1.bf16.msra.mxu0 %v198
    %304 = vmatprep.subr.bf16.mxu0 %v197
    %305 = vmatpush1.bf16.msra.mxu0 %v196
    %306 = vmatprep.subr.bf16.mxu0 %v195
    %307 = vmatpush1.bf16.msra.mxu0 %v194
    %308 = vmatprep.subr.bf16.mxu0 0
    %309 = vmatpush2.bf16.msra.mxu0 0
    %310 = vmatprep.subr.bf16.mxu0 0
    %311 = vmatpush2.bf16.msra.mxu0 0
    %312 = vmatprep.subr.bf16.mxu0 0
    %313 = vmatpush2.bf16.msra.mxu0 0
    %314 = vmatprep.subr.bf16.mxu0 0
    %315 = vmatpush2.bf16.msra.mxu0 0
    %316 = vmatprep.subr.bf16.mxu0 0
    %317 = vmatpush2.bf16.msra.mxu0 0
    %318 = vmatprep.subr.bf16.mxu0 0
    %319 = vmatpush2.bf16.msra.mxu0 0
    %320 = vmatprep.subr.bf16.mxu0 0
    %321 = vmatpush2.bf16.msra.mxu0 0
    %322 = vmatprep.subr.bf16.mxu0 0
    %323 = vmatpush2.bf16.msra.mxu0 0
    %324 = vmatprep.mubr.bf16.mxu0 0
    %325 = vmatmul.mubr.bf16.gmra.mxu0 %v290
    %v326 = vpop.f32.mrf.mxu0
    %v327 = vadd.f32 %v92, %v326
    %v328 = vpop.f32.mrf.mxu0
    %v329 = vadd.f32 %v96, %v328
    %v330 = vpop.f32.mrf.mxu0
    %v331 = vpop.f32.mrf.mxu0
    %332 = vdwg.mxu0
    %v335 = vrot.slane %v148, 2
    %v336 = vrot.slane %v150, 2
    %v339 = vadd.f32 %v327, %v335
    %v340 = vadd.f32 %v329, %v336
    %v341 = vxor.u32 %v339, 2147483648
    %v342 = vxor.u32 %v340, 2147483648
    %v343 = vmul.f32 %v341, 1.442695
    %v344 = vpow.pop %v343
    %v345 = vmul.f32 %v342, 1.442695
    %v346 = vpow.pop %v345
    %v347 = vadd.f32 %v344, 1.0
    %v348 = vadd.f32 %v346, 1.0
    %v349 = vrcp.pop %v347
    %v350 = vmul.f32 1.0, %v349
    %v351 = vrcp.pop %v348
    %v352 = vmul.f32 1.0, %v351
    %v353 = vtanh.pop %v339
    %v354 = vtanh.pop %v340
    %v355 = vmul.f32 %v350, %v276
    %357 = vrot.lane.b32.xlu0 %v353, 64
    %v358 = vpop.permute.xlu0 %357
    %v360 = vmul.f32 %v350, %v358
    %362 = vrot.lane.b32.xlu0 %v360, 32
    %v363 = vpop.permute.xlu0 %362
    %v365 = vadd.f32 %v355, %v363
    %v366 = vtanh.pop %v365
    %368 = vrot.lane.b32.xlu0 %v366, 64
    %v369 = vpop.permute.xlu0 %368
    %v371 = vmul.f32 %v350, %v369
    %373 = vrot.lane.b32.xlu0 %v162, 32
    %v374 = vpop.permute.xlu0 %373
    %v376 = vmul.f32 %v352, %v374
    %378 = vrot.lane.b32.xlu0 %v354, 64
    %v379 = vpop.permute.xlu0 %378
    %v381 = vmul.f32 %v352, %v379
    %383 = vrot.lane.b32.xlu0 %v381, 32
    %v384 = vpop.permute.xlu0 %383
    %v386 = vadd.f32 %v376, %v384
    %v387 = vtanh.pop %v386
    %389 = vrot.lane.b32.xlu0 %v387, 64
    %v390 = vpop.permute.xlu0 %389
    %v392 = vmul.f32 %v352, %v390
    %394 = vrot.lane.b32.xlu0 %v371, 32
    %v395 = vpop.permute.xlu0 %394
    %398 = vrot.lane.b32.xlu0 %v392, 64
    %v399 = vpop.permute.xlu0 %398
    %v401 = vsel %vm167, %v395, %v399
    %v402 = vpack.c.bf16 %v401, %v401
    %v404 = vsel %vm210, %v402, 0
    %406 = vmatprep.subr.bf16.mxu0 0
    %407 = vmatpush1.bf16.msra.mxu0 0
    %408 = vmatprep.subr.bf16.mxu0 0
    %409 = vmatpush1.bf16.msra.mxu0 0
    %410 = vmatprep.subr.bf16.mxu0 0
    %411 = vmatpush1.bf16.msra.mxu0 0
    %412 = vmatprep.subr.bf16.mxu0 0
    %413 = vmatpush1.bf16.msra.mxu0 0
    %414 = vmatprep.subr.bf16.mxu0 %v201
    %415 = vmatpush1.bf16.msra.mxu0 %v200
    %416 = vmatprep.subr.bf16.mxu0 %v199
    %417 = vmatpush1.bf16.msra.mxu0 %v198
    %418 = vmatprep.subr.bf16.mxu0 %v197
    %419 = vmatpush1.bf16.msra.mxu0 %v196
    %420 = vmatprep.subr.bf16.mxu0 %v195
    %421 = vmatpush1.bf16.msra.mxu0 %v194
    %422 = vmatprep.subr.bf16.mxu0 0
    %423 = vmatpush2.bf16.msra.mxu0 0
    %424 = vmatprep.subr.bf16.mxu0 0
    %425 = vmatpush2.bf16.msra.mxu0 0
    %426 = vmatprep.subr.bf16.mxu0 0
    %427 = vmatpush2.bf16.msra.mxu0 0
    %428 = vmatprep.subr.bf16.mxu0 0
    %429 = vmatpush2.bf16.msra.mxu0 0
    %430 = vmatprep.subr.bf16.mxu0 0
    %431 = vmatpush2.bf16.msra.mxu0 0
    %432 = vmatprep.subr.bf16.mxu0 0
    %433 = vmatpush2.bf16.msra.mxu0 0
    %434 = vmatprep.subr.bf16.mxu0 0
    %435 = vmatpush2.bf16.msra.mxu0 0
    %436 = vmatprep.subr.bf16.mxu0 0
    %437 = vmatpush2.bf16.msra.mxu0 0
    %438 = vmatprep.mubr.bf16.mxu0 0
    %439 = vmatmul.mubr.bf16.gmra.mxu0 %v404
    %v440 = vpop.f32.mrf.mxu0
    %v441 = vadd.f32 %v92, %v440
    %v442 = vpop.f32.mrf.mxu0
    %v443 = vadd.f32 %v96, %v442
    %v444 = vpop.f32.mrf.mxu0
    %v445 = vpop.f32.mrf.mxu0
    %446 = vdwg.mxu0
    %v447 = vrot.slane %v148, 4
    %v448 = vrot.slane %v150, 4
    %v451 = vadd.f32 %v441, %v447
    %v452 = vadd.f32 %v443, %v448
    %v453 = vxor.u32 %v451, 2147483648
    %v454 = vxor.u32 %v452, 2147483648
    %v455 = vmul.f32 %v453, 1.442695
    %v456 = vpow.pop %v455
    %v457 = vmul.f32 %v454, 1.442695
    %v458 = vpow.pop %v457
    %v459 = vadd.f32 %v456, 1.0
    %v460 = vadd.f32 %v458, 1.0
    %v461 = vrcp.pop %v459
    %v462 = vmul.f32 1.0, %v461
    %v463 = vrcp.pop %v460
    %v464 = vmul.f32 1.0, %v463
    %v465 = vtanh.pop %v451
    %v466 = vtanh.pop %v452
    %v467 = vmul.f32 %v462, %v365
    %469 = vrot.lane.b32.xlu0 %v465, 64
    %v470 = vpop.permute.xlu0 %469
    %v472 = vmul.f32 %v462, %v470
    %474 = vrot.lane.b32.xlu0 %v472, 32
    %v475 = vpop.permute.xlu0 %474
    %v477 = vadd.f32 %v467, %v475
    %v478 = vtanh.pop %v477
    %480 = vrot.lane.b32.xlu0 %v478, 64
    %v481 = vpop.permute.xlu0 %480
    %v483 = vmul.f32 %v462, %v481
    %v484 = vmul.f32 %v464, %v386
    %486 = vrot.lane.b32.xlu0 %v466, 64
    %v487 = vpop.permute.xlu0 %486
    %v489 = vmul.f32 %v464, %v487
    %491 = vrot.lane.b32.xlu0 %v489, 32
    %v492 = vpop.permute.xlu0 %491
    %v494 = vadd.f32 %v484, %v492
    %v495 = vtanh.pop %v494
    %497 = vrot.lane.b32.xlu0 %v495, 64
    %v498 = vpop.permute.xlu0 %497
    %v500 = vmul.f32 %v464, %v498
    %502 = vrot.lane.b32.xlu0 %v483, 32
    %v503 = vpop.permute.xlu0 %502
    %506 = vrot.lane.b32.xlu0 %v500, 64
    %v507 = vpop.permute.xlu0 %506
    %v509 = vsel %vm167, %v503, %v507
    %v510 = vpack.c.bf16 %v509, %v509
    %v512 = vsel %vm210, %v510, 0
    %514 = vmatprep.subr.bf16.mxu0 0
    %515 = vmatpush1.bf16.msra.mxu0 0
    %516 = vmatprep.subr.bf16.mxu0 0
    %517 = vmatpush1.bf16.msra.mxu0 0
    %518 = vmatprep.subr.bf16.mxu0 0
    %519 = vmatpush1.bf16.msra.mxu0 0
    %520 = vmatprep.subr.bf16.mxu0 0
    %521 = vmatpush1.bf16.msra.mxu0 0
    %522 = vmatprep.subr.bf16.mxu0 %v201
    %523 = vmatpush1.bf16.msra.mxu0 %v200
    %524 = vmatprep.subr.bf16.mxu0 %v199
    %525 = vmatpush1.bf16.msra.mxu0 %v198
    %526 = vmatprep.subr.bf16.mxu0 %v197
    %527 = vmatpush1.bf16.msra.mxu0 %v196
    %528 = vmatprep.subr.bf16.mxu0 %v195
    %529 = vmatpush1.bf16.msra.mxu0 %v194
    %530 = vmatprep.subr.bf16.mxu0 0
    %531 = vmatpush2.bf16.msra.mxu0 0
    %532 = vmatprep.subr.bf16.mxu0 0
    %533 = vmatpush2.bf16.msra.mxu0 0
    %534 = vmatprep.subr.bf16.mxu0 0
    %535 = vmatpush2.bf16.msra.mxu0 0
    %536 = vmatprep.subr.bf16.mxu0 0
    %537 = vmatpush2.bf16.msra.mxu0 0
    %538 = vmatprep.subr.bf16.mxu0 0
    %539 = vmatpush2.bf16.msra.mxu0 0
    %540 = vmatprep.subr.bf16.mxu0 0
    %541 = vmatpush2.bf16.msra.mxu0 0
    %542 = vmatprep.subr.bf16.mxu0 0
    %543 = vmatpush2.bf16.msra.mxu0 0
    %544 = vmatprep.subr.bf16.mxu0 0
    %545 = vmatpush2.bf16.msra.mxu0 0
    %546 = vmatprep.mubr.bf16.mxu0 0
    %547 = vmatmul.mubr.bf16.gmra.mxu0 %v512
    %v548 = vpop.f32.mrf.mxu0
    %v549 = vadd.f32 %v92, %v548
    %v550 = vpop.f32.mrf.mxu0
    %v551 = vadd.f32 %v96, %v550
    %v552 = vpop.f32.mrf.mxu0
    %v553 = vpop.f32.mrf.mxu0
    %554 = vdwg.mxu0
    %v555 = vrot.slane %v148, 6
    %v556 = vrot.slane %v150, 6
    %v559 = vadd.f32 %v549, %v555
    %v560 = vadd.f32 %v551, %v556
    %v561 = vxor.u32 %v559, 2147483648
    %v562 = vxor.u32 %v560, 2147483648
    %v563 = vmul.f32 %v561, 1.442695
    %v564 = vpow.pop %v563
    %v565 = vmul.f32 %v562, 1.442695
    %v566 = vpow.pop %v565
    %v567 = vadd.f32 %v564, 1.0
    %v568 = vadd.f32 %v566, 1.0
    %v569 = vrcp.pop %v567
    %v570 = vmul.f32 1.0, %v569
    %v571 = vrcp.pop %v568
    %v572 = vmul.f32 1.0, %v571
    %v573 = vtanh.pop %v559
    %v574 = vtanh.pop %v560
    %v575 = vmul.f32 %v570, %v477
    %577 = vrot.lane.b32.xlu0 %v573, 64
    %v578 = vpop.permute.xlu0 %577
    %v580 = vmul.f32 %v570, %v578
    %582 = vrot.lane.b32.xlu0 %v580, 32
    %v583 = vpop.permute.xlu0 %582
    %v585 = vadd.f32 %v575, %v583
    %v586 = vtanh.pop %v585
    %588 = vrot.lane.b32.xlu0 %v586, 64
    %v589 = vpop.permute.xlu0 %588
    %v591 = vmul.f32 %v570, %v589
    %v592 = vmul.f32 %v572, %v494
    %594 = vrot.lane.b32.xlu0 %v574, 64
    %v595 = vpop.permute.xlu0 %594
    %v597 = vmul.f32 %v572, %v595
    %599 = vrot.lane.b32.xlu0 %v597, 32
    %v600 = vpop.permute.xlu0 %599
    %v602 = vadd.f32 %v592, %v600
    %v603 = vtanh.pop %v602
    %605 = vrot.lane.b32.xlu0 %v603, 64
    %v606 = vpop.permute.xlu0 %605
    %v608 = vmul.f32 %v572, %v606
    %610 = vrot.lane.b32.xlu0 %v591, 32
    %v611 = vpop.permute.xlu0 %610
    %614 = vrot.lane.b32.xlu0 %v608, 64
    %v615 = vpop.permute.xlu0 %614
    %v617 = vsel %vm167, %v611, %v615
    %v618 = vpack.c.bf16 %v617, %v617
    %v620 = vsel %vm210, %v618, 0
    %622 = vmatprep.subr.bf16.mxu0 0
    %623 = vmatpush1.bf16.msra.mxu0 0
    %624 = vmatprep.subr.bf16.mxu0 0
    %625 = vmatpush1.bf16.msra.mxu0 0
    %626 = vmatprep.subr.bf16.mxu0 0
    %627 = vmatpush1.bf16.msra.mxu0 0
    %628 = vmatprep.subr.bf16.mxu0 0
    %629 = vmatpush1.bf16.msra.mxu0 0
    %630 = vmatprep.subr.bf16.mxu0 %v201
    %631 = vmatpush1.bf16.msra.mxu0 %v200
    %632 = vmatprep.subr.bf16.mxu0 %v199
    %633 = vmatpush1.bf16.msra.mxu0 %v198
    %634 = vmatprep.subr.bf16.mxu0 %v197
    %635 = vmatpush1.bf16.msra.mxu0 %v196
    %636 = vmatprep.subr.bf16.mxu0 %v195
    %637 = vmatpush1.bf16.msra.mxu0 %v194
    %638 = vmatprep.subr.bf16.mxu0 0
    %639 = vmatpush2.bf16.msra.mxu0 0
    %640 = vmatprep.subr.bf16.mxu0 0
    %641 = vmatpush2.bf16.msra.mxu0 0
    %642 = vmatprep.subr.bf16.mxu0 0
    %643 = vmatpush2.bf16.msra.mxu0 0
    %644 = vmatprep.subr.bf16.mxu0 0
    %645 = vmatpush2.bf16.msra.mxu0 0
    %646 = vmatprep.subr.bf16.mxu0 0
    %647 = vmatpush2.bf16.msra.mxu0 0
    %648 = vmatprep.subr.bf16.mxu0 0
    %649 = vmatpush2.bf16.msra.mxu0 0
    %650 = vmatprep.subr.bf16.mxu0 0
    %651 = vmatpush2.bf16.msra.mxu0 0
    %652 = vmatprep.subr.bf16.mxu0 0
    %653 = vmatpush2.bf16.msra.mxu0 0
    %654 = vmatprep.mubr.bf16.mxu0 0
    %655 = vmatmul.mubr.bf16.gmra.mxu0 %v620
    %v656 = vpop.f32.mrf.mxu0
    %v657 = vadd.f32 %v92, %v656
    %v658 = vpop.f32.mrf.mxu0
    %v659 = vadd.f32 %v96, %v658
    %v660 = vpop.f32.mrf.mxu0
    %v661 = vpop.f32.mrf.mxu0
    %662 = vdwg.mxu0
    %v663 = vadd.f32 %v657, %v152
    %v664 = vadd.f32 %v659, %v154
    %v665 = vxor.u32 %v663, 2147483648
    %v666 = vxor.u32 %v664, 2147483648
    %v667 = vmul.f32 %v665, 1.442695
    %v668 = vpow.pop %v667
    %v669 = vmul.f32 %v666, 1.442695
    %v670 = vpow.pop %v669
    %v671 = vadd.f32 %v668, 1.0
    %v672 = vadd.f32 %v670, 1.0
    %v673 = vrcp.pop %v671
    %v674 = vmul.f32 1.0, %v673
    %v675 = vrcp.pop %v672
    %v676 = vmul.f32 1.0, %v675
    %v677 = vtanh.pop %v663
    %v678 = vtanh.pop %v664
    %v679 = vmul.f32 %v674, %v585
    %681 = vrot.lane.b32.xlu0 %v677, 64
    %v682 = vpop.permute.xlu0 %681
    %v684 = vmul.f32 %v674, %v682
    %686 = vrot.lane.b32.xlu0 %v684, 32
    %v687 = vpop.permute.xlu0 %686
    %v689 = vadd.f32 %v679, %v687
    %v690 = vtanh.pop %v689
    %692 = vrot.lane.b32.xlu0 %v690, 64
    %v693 = vpop.permute.xlu0 %692
    %v695 = vmul.f32 %v674, %v693
    %v696 = vmul.f32 %v676, %v602
    %698 = vrot.lane.b32.xlu0 %v678, 64
    %v699 = vpop.permute.xlu0 %698
    %v701 = vmul.f32 %v676, %v699
    %703 = vrot.lane.b32.xlu0 %v701, 32
    %v704 = vpop.permute.xlu0 %703
    %v706 = vadd.f32 %v696, %v704
    %v707 = vtanh.pop %v706
    %709 = vrot.lane.b32.xlu0 %v707, 64
    %v710 = vpop.permute.xlu0 %709
    %v712 = vmul.f32 %v676, %v710
    %714 = vrot.lane.b32.xlu0 %v695, 32
    %v715 = vpop.permute.xlu0 %714
    %718 = vrot.lane.b32.xlu0 %v712, 64
    %v719 = vpop.permute.xlu0 %718
    %v721 = vsel %vm167, %v715, %v719
    %v722 = vpack.c.bf16 %v721, %v721
    %v724 = vsel %vm210, %v722, 0
    %726 = vmatprep.subr.bf16.mxu0 0
    %727 = vmatpush1.bf16.msra.mxu0 0
    %728 = vmatprep.subr.bf16.mxu0 0
    %729 = vmatpush1.bf16.msra.mxu0 0
    %730 = vmatprep.subr.bf16.mxu0 0
    %731 = vmatpush1.bf16.msra.mxu0 0
    %732 = vmatprep.subr.bf16.mxu0 0
    %733 = vmatpush1.bf16.msra.mxu0 0
    %734 = vmatprep.subr.bf16.mxu0 %v201
    %735 = vmatpush1.bf16.msra.mxu0 %v200
    %736 = vmatprep.subr.bf16.mxu0 %v199
    %737 = vmatpush1.bf16.msra.mxu0 %v198
    %738 = vmatprep.subr.bf16.mxu0 %v197
    %739 = vmatpush1.bf16.msra.mxu0 %v196
    %740 = vmatprep.subr.bf16.mxu0 %v195
    %741 = vmatpush1.bf16.msra.mxu0 %v194
    %742 = vmatprep.subr.bf16.mxu0 0
    %743 = vmatpush2.bf16.msra.mxu0 0
    %744 = vmatprep.subr.bf16.mxu0 0
    %745 = vmatpush2.bf16.msra.mxu0 0
    %746 = vmatprep.subr.bf16.mxu0 0
    %747 = vmatpush2.bf16.msra.mxu0 0
    %748 = vmatprep.subr.bf16.mxu0 0
    %749 = vmatpush2.bf16.msra.mxu0 0
    %750 = vmatprep.subr.bf16.mxu0 0
    %751 = vmatpush2.bf16.msra.mxu0 0
    %752 = vmatprep.subr.bf16.mxu0 0
    %753 = vmatpush2.bf16.msra.mxu0 0
    %754 = vmatprep.subr.bf16.mxu0 0
    %755 = vmatpush2.bf16.msra.mxu0 0
    %756 = vmatprep.subr.bf16.mxu0 0
    %757 = vmatpush2.bf16.msra.mxu0 0
    %758 = vmatprep.mubr.bf16.mxu0 0
    %759 = vmatmul.mubr.bf16.gmra.mxu0 %v724
    %v760 = vpop.f32.mrf.mxu0
    %v761 = vadd.f32 %v92, %v760
    %v762 = vpop.f32.mrf.mxu0
    %v763 = vadd.f32 %v96, %v762
    %v764 = vpop.f32.mrf.mxu0
    %v765 = vpop.f32.mrf.mxu0
    %766 = vdwg.mxu0
    %v769 = vrot.slane %v152, 2
    %v770 = vrot.slane %v154, 2
    %v773 = vadd.f32 %v761, %v769
    %v774 = vadd.f32 %v763, %v770
    %v775 = vxor.u32 %v773, 2147483648
    %v776 = vxor.u32 %v774, 2147483648
    %v777 = vmul.f32 %v775, 1.442695
    %v778 = vpow.pop %v777
    %v779 = vmul.f32 %v776, 1.442695
    %v780 = vpow.pop %v779
    %v781 = vadd.f32 %v778, 1.0
    %v782 = vadd.f32 %v780, 1.0
    %v783 = vrcp.pop %v781
    %v784 = vmul.f32 1.0, %v783
    %v785 = vrcp.pop %v782
    %v786 = vmul.f32 1.0, %v785
    %v787 = vtanh.pop %v773
    %v788 = vtanh.pop %v774
    %v789 = vmul.f32 %v784, %v689
    %791 = vrot.lane.b32.xlu0 %v787, 64
    %v792 = vpop.permute.xlu0 %791
    %v794 = vmul.f32 %v784, %v792
    %796 = vrot.lane.b32.xlu0 %v794, 32
    %v797 = vpop.permute.xlu0 %796
    %v799 = vadd.f32 %v789, %v797
    %v800 = vtanh.pop %v799
    %802 = vrot.lane.b32.xlu0 %v800, 64
    %v803 = vpop.permute.xlu0 %802
    %v805 = vmul.f32 %v784, %v803
    %v806 = vmul.f32 %v786, %v706
    %808 = vrot.lane.b32.xlu0 %v788, 64
    %v809 = vpop.permute.xlu0 %808
    %v811 = vmul.f32 %v786, %v809
    %813 = vrot.lane.b32.xlu0 %v811, 32
    %v814 = vpop.permute.xlu0 %813
    %v816 = vadd.f32 %v806, %v814
    %v817 = vtanh.pop %v816
    %819 = vrot.lane.b32.xlu0 %v817, 64
    %v820 = vpop.permute.xlu0 %819
    %v822 = vmul.f32 %v786, %v820
    %824 = vrot.lane.b32.xlu0 %v805, 32
    %v825 = vpop.permute.xlu0 %824
    %828 = vrot.lane.b32.xlu0 %v822, 64
    %v829 = vpop.permute.xlu0 %828
    %v831 = vsel %vm167, %v825, %v829
    %v832 = vpack.c.bf16 %v831, %v831
    %v834 = vsel %vm210, %v832, 0
    %836 = vmatprep.subr.bf16.mxu0 0
    %837 = vmatpush1.bf16.msra.mxu0 0
    %838 = vmatprep.subr.bf16.mxu0 0
    %839 = vmatpush1.bf16.msra.mxu0 0
    %840 = vmatprep.subr.bf16.mxu0 0
    %841 = vmatpush1.bf16.msra.mxu0 0
    %842 = vmatprep.subr.bf16.mxu0 0
    %843 = vmatpush1.bf16.msra.mxu0 0
    %844 = vmatprep.subr.bf16.mxu0 %v201
    %845 = vmatpush1.bf16.msra.mxu0 %v200
    %846 = vmatprep.subr.bf16.mxu0 %v199
    %847 = vmatpush1.bf16.msra.mxu0 %v198
    %848 = vmatprep.subr.bf16.mxu0 %v197
    %849 = vmatpush1.bf16.msra.mxu0 %v196
    %850 = vmatprep.subr.bf16.mxu0 %v195
    %851 = vmatpush1.bf16.msra.mxu0 %v194
    %852 = vmatprep.subr.bf16.mxu0 0
    %853 = vmatpush2.bf16.msra.mxu0 0
    %854 = vmatprep.subr.bf16.mxu0 0
    %855 = vmatpush2.bf16.msra.mxu0 0
    %856 = vmatprep.subr.bf16.mxu0 0
    %857 = vmatpush2.bf16.msra.mxu0 0
    %858 = vmatprep.subr.bf16.mxu0 0
    %859 = vmatpush2.bf16.msra.mxu0 0
    %860 = vmatprep.subr.bf16.mxu0 0
    %861 = vmatpush2.bf16.msra.mxu0 0
    %862 = vmatprep.subr.bf16.mxu0 0
    %863 = vmatpush2.bf16.msra.mxu0 0
    %864 = vmatprep.subr.bf16.mxu0 0
    %865 = vmatpush2.bf16.msra.mxu0 0
    %866 = vmatprep.subr.bf16.mxu0 0
    %867 = vmatpush2.bf16.msra.mxu0 0
    %868 = vmatprep.mubr.bf16.mxu0 0
    %869 = vmatmul.mubr.bf16.gmra.mxu0 %v834
    %v870 = vpop.f32.mrf.mxu0
    %v871 = vadd.f32 %v92, %v870
    %v872 = vpop.f32.mrf.mxu0
    %v873 = vadd.f32 %v96, %v872
    %v874 = vpop.f32.mrf.mxu0
    %v875 = vpop.f32.mrf.mxu0
    %876 = vdwg.mxu0
    %v877 = vrot.slane %v152, 4
    %v878 = vrot.slane %v154, 4
    %v881 = vadd.f32 %v871, %v877
    %v882 = vadd.f32 %v873, %v878
    %v883 = vxor.u32 %v881, 2147483648
    %v884 = vxor.u32 %v882, 2147483648
    %v885 = vmul.f32 %v883, 1.442695
    %v886 = vpow.pop %v885
    %v887 = vmul.f32 %v884, 1.442695
    %v888 = vpow.pop %v887
    %v889 = vadd.f32 %v886, 1.0
    %v890 = vadd.f32 %v888, 1.0
    %v891 = vrcp.pop %v889
    %v892 = vmul.f32 1.0, %v891
    %v893 = vrcp.pop %v890
    %v894 = vmul.f32 1.0, %v893
    %v895 = vtanh.pop %v881
    %v896 = vtanh.pop %v882
    %v897 = vmul.f32 %v892, %v799
    %899 = vrot.lane.b32.xlu0 %v895, 64
    %v900 = vpop.permute.xlu0 %899
    %v902 = vmul.f32 %v892, %v900
    %904 = vrot.lane.b32.xlu0 %v902, 32
    %v905 = vpop.permute.xlu0 %904
    %v907 = vadd.f32 %v897, %v905
    %v908 = vtanh.pop %v907
    %910 = vrot.lane.b32.xlu0 %v908, 64
    %v911 = vpop.permute.xlu0 %910
    %v913 = vmul.f32 %v892, %v911
    %v914 = vmul.f32 %v894, %v816
    %916 = vrot.lane.b32.xlu0 %v896, 64
    %v917 = vpop.permute.xlu0 %916
    %v919 = vmul.f32 %v894, %v917
    %921 = vrot.lane.b32.xlu0 %v919, 32
    %v922 = vpop.permute.xlu0 %921
    %v924 = vadd.f32 %v914, %v922
    %v925 = vtanh.pop %v924
    %927 = vrot.lane.b32.xlu0 %v925, 64
    %v928 = vpop.permute.xlu0 %927
    %v930 = vmul.f32 %v894, %v928
    %932 = vrot.lane.b32.xlu0 %v913, 32
    %v933 = vpop.permute.xlu0 %932
    %936 = vrot.lane.b32.xlu0 %v930, 64
    %v937 = vpop.permute.xlu0 %936
    %v939 = vsel %vm167, %v933, %v937
    %v940 = vpack.c.bf16 %v939, %v939
    %v942 = vsel %vm210, %v940, 0
    %944 = vmatprep.subr.bf16.mxu0 0
    %945 = vmatpush1.bf16.msra.mxu0 0
    %946 = vmatprep.subr.bf16.mxu0 0
    %947 = vmatpush1.bf16.msra.mxu0 0
    %948 = vmatprep.subr.bf16.mxu0 0
    %949 = vmatpush1.bf16.msra.mxu0 0
    %950 = vmatprep.subr.bf16.mxu0 0
    %951 = vmatpush1.bf16.msra.mxu0 0
    %952 = vmatprep.subr.bf16.mxu0 %v201
    %953 = vmatpush1.bf16.msra.mxu0 %v200
    %954 = vmatprep.subr.bf16.mxu0 %v199
    %955 = vmatpush1.bf16.msra.mxu0 %v198
    %956 = vmatprep.subr.bf16.mxu0 %v197
    %957 = vmatpush1.bf16.msra.mxu0 %v196
    %958 = vmatprep.subr.bf16.mxu0 %v195
    %959 = vmatpush1.bf16.msra.mxu0 %v194
    %960 = vmatprep.subr.bf16.mxu0 0
    %961 = vmatpush2.bf16.msra.mxu0 0
    %962 = vmatprep.subr.bf16.mxu0 0
    %963 = vmatpush2.bf16.msra.mxu0 0
    %964 = vmatprep.subr.bf16.mxu0 0
    %965 = vmatpush2.bf16.msra.mxu0 0
    %966 = vmatprep.subr.bf16.mxu0 0
    %967 = vmatpush2.bf16.msra.mxu0 0
    %968 = vmatprep.subr.bf16.mxu0 0
    %969 = vmatpush2.bf16.msra.mxu0 0
    %970 = vmatprep.subr.bf16.mxu0 0
    %971 = vmatpush2.bf16.msra.mxu0 0
    %972 = vmatprep.subr.bf16.mxu0 0
    %973 = vmatpush2.bf16.msra.mxu0 0
    %974 = vmatprep.subr.bf16.mxu0 0
    %975 = vmatpush2.bf16.msra.mxu0 0
    %976 = vmatprep.mubr.bf16.mxu0 0
    %977 = vmatmul.mubr.bf16.gmra.mxu0 %v942
    %v978 = vpop.f32.mrf.mxu0
    %v979 = vadd.f32 %v92, %v978
    %v980 = vpop.f32.mrf.mxu0
    %v981 = vadd.f32 %v96, %v980
    %v982 = vpop.f32.mrf.mxu0
    %v983 = vpop.f32.mrf.mxu0
    %984 = vdwg.mxu0
    %v985 = vrot.slane %v152, 6
    %v986 = vrot.slane %v154, 6
    %v989 = vadd.f32 %v979, %v985
    %v990 = vadd.f32 %v981, %v986
    %v991 = vxor.u32 %v989, 2147483648
    %v992 = vxor.u32 %v990, 2147483648
    %v993 = vmul.f32 %v991, 1.442695
    %v994 = vpow.pop %v993
    %v995 = vmul.f32 %v992, 1.442695
    %v996 = vpow.pop %v995
    %v997 = vadd.f32 %v994, 1.0
    %v998 = vadd.f32 %v996, 1.0
    %v999 = vrcp.pop %v997
    %v1000 = vmul.f32 1.0, %v999
    %v1001 = vrcp.pop %v998
    %v1002 = vmul.f32 1.0, %v1001
    %v1003 = vtanh.pop %v989
    %v1004 = vtanh.pop %v990
    %v1005 = vmul.f32 %v1000, %v907
    %1007 = vrot.lane.b32.xlu0 %v1003, 64
    %v1008 = vpop.permute.xlu0 %1007
    %v1010 = vmul.f32 %v1000, %v1008
    %1012 = vrot.lane.b32.xlu0 %v1010, 32
    %v1013 = vpop.permute.xlu0 %1012
    %v1015 = vadd.f32 %v1005, %v1013
    %v1016 = vtanh.pop %v1015
    %1018 = vrot.lane.b32.xlu0 %v1016, 64
    %v1019 = vpop.permute.xlu0 %1018
    %v1021 = vmul.f32 %v1000, %v1019
    %v1022 = vmul.f32 %v1002, %v924
    %1024 = vrot.lane.b32.xlu0 %v1004, 64
    %v1025 = vpop.permute.xlu0 %1024
    %v1027 = vmul.f32 %v1002, %v1025
    %1029 = vrot.lane.b32.xlu0 %v1027, 32
    %v1030 = vpop.permute.xlu0 %1029
    %v1032 = vadd.f32 %v1022, %v1030
    %v1033 = vtanh.pop %v1032
    %1035 = vrot.lane.b32.xlu0 %v1033, 64
    %v1036 = vpop.permute.xlu0 %1035
    %v1038 = vmul.f32 %v1002, %v1036
    %1040 = vrot.lane.b32.xlu0 %v1021, 32
    %v1041 = vpop.permute.xlu0 %1040
    %1044 = vrot.lane.b32.xlu0 %v1038, 64
    %v1045 = vpop.permute.xlu0 %1044
    %v1047 = vsel %vm167, %v1041, %v1045
    %v1048 = vpack.c.bf16 %v1047, %v1047
    %v1050 = vsel %vm210, %v1048, 0
    %1052 = vmatprep.subr.bf16.mxu0 0
    %1053 = vmatpush1.bf16.msra.mxu0 0
    %1054 = vmatprep.subr.bf16.mxu0 0
    %1055 = vmatpush1.bf16.msra.mxu0 0
    %1056 = vmatprep.subr.bf16.mxu0 0
    %1057 = vmatpush1.bf16.msra.mxu0 0
    %1058 = vmatprep.subr.bf16.mxu0 0
    %1059 = vmatpush1.bf16.msra.mxu0 0
    %1060 = vmatprep.subr.bf16.mxu0 %v201
    %1061 = vmatpush1.bf16.msra.mxu0 %v200
    %1062 = vmatprep.subr.bf16.mxu0 %v199
    %1063 = vmatpush1.bf16.msra.mxu0 %v198
    %1064 = vmatprep.subr.bf16.mxu0 %v197
    %1065 = vmatpush1.bf16.msra.mxu0 %v196
    %1066 = vmatprep.subr.bf16.mxu0 %v195
    %1067 = vmatpush1.bf16.msra.mxu0 %v194
    %1068 = vmatprep.subr.bf16.mxu0 0
    %1069 = vmatpush2.bf16.msra.mxu0 0
    %1070 = vmatprep.subr.bf16.mxu0 0
    %1071 = vmatpush2.bf16.msra.mxu0 0
    %1072 = vmatprep.subr.bf16.mxu0 0
    %1073 = vmatpush2.bf16.msra.mxu0 0
    %1074 = vmatprep.subr.bf16.mxu0 0
    %1075 = vmatpush2.bf16.msra.mxu0 0
    %1076 = vmatprep.subr.bf16.mxu0 0
    %1077 = vmatpush2.bf16.msra.mxu0 0
    %1078 = vmatprep.subr.bf16.mxu0 0
    %1079 = vmatpush2.bf16.msra.mxu0 0
    %1080 = vmatprep.subr.bf16.mxu0 0
    %1081 = vmatpush2.bf16.msra.mxu0 0
    %1082 = vmatprep.subr.bf16.mxu0 0
    %1083 = vmatpush2.bf16.msra.mxu0 0
    %1084 = vmatprep.mubr.bf16.mxu0 0
    %1085 = vmatmul.mubr.bf16.gmra.mxu0 %v1050
    %v1086 = vpop.f32.mrf.mxu0
    %v1087 = vpop.f32.mrf.mxu0
    %v1088 = vadd.f32 %v96, %v1087
    %v1089 = vpop.f32.mrf.mxu0
    %v1090 = vpop.f32.mrf.mxu0
    %1091 = vdwg.mxu0
    %v1092 = vxor.u32 %v1088, 2147483648
    %v1093 = vmul.f32 %v1092, 1.442695
    %v1094 = vpow.pop %v1093
    %v1095 = vadd.f32 %v1094, 1.0
    %v1096 = vrcp.pop %v1095
    %v1097 = vmul.f32 1.0, %v1096
    %v1098 = vtanh.pop %v1088
    %v1099 = vmul.f32 %v1097, %v1032
    %1101 = vrot.lane.b32.xlu0 %v1098, 64
    %v1102 = vpop.permute.xlu0 %1101
    %v1104 = vmul.f32 %v1097, %v1102
    %1106 = vrot.lane.b32.xlu0 %v1104, 32
    %v1107 = vpop.permute.xlu0 %1106
    %v1109 = vadd.f32 %v1099, %v1107
    %v1110 = vtanh.pop %v1109
    %1112 = vrot.lane.b32.xlu0 %v1110, 64
    %v1113 = vpop.permute.xlu0 %1112
    %v1115 = vmul.f32 %v1097, %v1113
    %v1116 = vld [vmem:[#allocation8 + $0x10] sm:$0xff]
    %v1117 = vld [vmem:[#allocation8 + $0x20] sm:$0xff]
    %v1118 = vld [vmem:[#allocation8 + $0x30] sm:$0xff]
    %v1119 = vld [vmem:[#allocation8 + $0x40] sm:$0xff]
    %v1120 = vld [vmem:[#allocation8 + $0x50] sm:$0xff]
    %v1121 = vld [vmem:[#allocation8 + $0x60] sm:$0xff]
    %v1122 = vld [vmem:[#allocation8 + $0x70] ss:$0 sm:$0xff]
    %1124 = vrot.lane.b32.xlu0 %v1115, 32
    %v1125 = vpop.permute.xlu0 %1124
    %v1126 = vsel %vm167, %v1125, 0
    %1128 = vmatprep.subr.mxu0 0.0
    %1129 = vmatpush1.msra.mxu0 0.0
    %1130 = vmatprep.subr.mxu0 0.0
    %1131 = vmatpush1.msra.mxu0 0.0
    %1132 = vmatprep.subr.mxu0 0.0
    %1133 = vmatpush1.msra.mxu0 0.0
    %1134 = vmatprep.subr.mxu0 0.0
    %1135 = vmatpush1.msra.mxu0 0.0
    %1136 = vmatprep.subr.mxu0 0.0
    %1137 = vmatpush1.msra.mxu0 0.0
    %1138 = vmatprep.subr.mxu0 0.0
    %1139 = vmatpush1.msra.mxu0 0.0
    %1140 = vmatprep.subr.mxu0 0.0
    %1141 = vmatpush1.msra.mxu0 0.0
    %1142 = vmatprep.subr.mxu0 0.0
    %1143 = vmatpush1.msra.mxu0 0.0
    %1144 = vmatprep.subr.mxu0 0.0
    %1145 = vmatpush1.msra.mxu0 0.0
    %1146 = vmatprep.subr.mxu0 0.0
    %1147 = vmatpush1.msra.mxu0 0.0
    %1148 = vmatprep.subr.mxu0 0.0
    %1149 = vmatpush1.msra.mxu0 0.0
    %1150 = vmatprep.subr.mxu0 0.0
    %1151 = vmatpush1.msra.mxu0 0.0
    %1152 = vmatprep.subr.mxu0 0.0
    %1153 = vmatpush1.msra.mxu0 %v1119
    %1154 = vmatprep.subr.mxu0 0.0
    %1155 = vmatpush1.msra.mxu0 %v1118
    %1156 = vmatprep.subr.mxu0 0.0
    %1157 = vmatpush1.msra.mxu0 %v1117
    %1158 = vmatprep.subr.mxu0 0.0
    %1159 = vmatpush1.msra.mxu0 %v1116
    %1160 = vmatprep.subr.mxu0 0.0
    %1161 = vmatpush2.msra.mxu0 0.0
    %1162 = vmatprep.subr.mxu0 0.0
    %1163 = vmatpush2.msra.mxu0 0.0
    %1164 = vmatprep.subr.mxu0 0.0
    %1165 = vmatpush2.msra.mxu0 0.0
    %1166 = vmatprep.subr.mxu0 0.0
    %1167 = vmatpush2.msra.mxu0 0.0
    %1168 = vmatprep.subr.mxu0 0.0
    %1169 = vmatpush2.msra.mxu0 0.0
    %1170 = vmatprep.subr.mxu0 0.0
    %1171 = vmatpush2.msra.mxu0 0.0
    %1172 = vmatprep.subr.mxu0 0.0
    %1173 = vmatpush2.msra.mxu0 0.0
    %1174 = vmatprep.subr.mxu0 0.0
    %1175 = vmatpush2.msra.mxu0 0.0
    %1176 = vmatprep.subr.mxu0 0.0
    %1177 = vmatpush2.msra.mxu0 0.0
    %1178 = vmatprep.subr.mxu0 0.0
    %1179 = vmatpush2.msra.mxu0 0.0
    %1180 = vmatprep.subr.mxu0 0.0
    %1181 = vmatpush2.msra.mxu0 0.0
    %1182 = vmatprep.subr.mxu0 0.0
    %1183 = vmatpush2.msra.mxu0 0.0
    %1184 = vmatprep.subr.mxu0 0.0
    %1185 = vmatpush2.msra.mxu0 0.0
    %1186 = vmatprep.subr.mxu0 0.0
    %1187 = vmatpush2.msra.mxu0 0.0
    %1188 = vmatprep.subr.mxu0 0.0
    %1189 = vmatpush2.msra.mxu0 0.0
    %1190 = vmatprep.subr.mxu0 0.0
    %1191 = vmatpush2.msra.mxu0 0.0
    %1192 = vmatprep.mubr.f32.mxu0 0.0
    %1193 = vmatmul.mubr.f32.gmra.mxu0 %v1126
    %v1194 = vpop.f32.mrf.mxu0
    %v1195 = vadd.f32 %v1122, %v1194
    %v1196 = vpop.f32.mrf.mxu0
    %1197 = vdwg.mxu0
    %v1198 = vmax.f32 %v1195, 0.0
    %1200 = vrot.lane.b32.xlu0 %v1122, 112
    %v1201 = vpop.permute.xlu0 %1200
    %v1204 = vsel %vm109, %v1198, 0
    %1206 = vmatprep.subr.mxu0 0.0
    %1207 = vmatpush1.msra.mxu0 0.0
    %1208 = vmatprep.subr.mxu0 0.0
    %1209 = vmatpush1.msra.mxu0 0.0
    %1210 = vmatprep.subr.mxu0 0.0
    %1211 = vmatpush1.msra.mxu0 0.0
    %1212 = vmatprep.subr.mxu0 0.0
    %1213 = vmatpush1.msra.mxu0 0.0
    %1214 = vmatprep.subr.mxu0 0.0
    %1215 = vmatpush1.msra.mxu0 0.0
    %1216 = vmatprep.subr.mxu0 0.0
    %1217 = vmatpush1.msra.mxu0 0.0
    %1218 = vmatprep.subr.mxu0 0.0
    %1219 = vmatpush1.msra.mxu0 0.0
    %1220 = vmatprep.subr.mxu0 0.0
    %1221 = vmatpush1.msra.mxu0 0.0
    %1222 = vmatprep.subr.mxu0 0.0
    %1223 = vmatpush1.msra.mxu0 0.0
    %1224 = vmatprep.subr.mxu0 0.0
    %1225 = vmatpush1.msra.mxu0 0.0
    %1226 = vmatprep.subr.mxu0 0.0
    %1227 = vmatpush1.msra.mxu0 0.0
    %1228 = vmatprep.subr.mxu0 0.0
    %1229 = vmatpush1.msra.mxu0 0.0
    %1230 = vmatprep.subr.mxu0 0.0
    %1231 = vmatpush1.msra.mxu0 0.0
    %1232 = vmatprep.subr.mxu0 0.0
    %1233 = vmatpush1.msra.mxu0 0.0
    %1234 = vmatprep.subr.mxu0 0.0
    %1235 = vmatpush1.msra.mxu0 %v1121
    %1236 = vmatprep.subr.mxu0 0.0
    %1237 = vmatpush1.msra.mxu0 %v1120
    %1238 = vmatprep.subr.mxu0 0.0
    %1239 = vmatpush2.msra.mxu0 0.0
    %1240 = vmatprep.subr.mxu0 0.0
    %1241 = vmatpush2.msra.mxu0 0.0
    %1242 = vmatprep.subr.mxu0 0.0
    %1243 = vmatpush2.msra.mxu0 0.0
    %1244 = vmatprep.subr.mxu0 0.0
    %1245 = vmatpush2.msra.mxu0 0.0
    %1246 = vmatprep.subr.mxu0 0.0
    %1247 = vmatpush2.msra.mxu0 0.0
    %1248 = vmatprep.subr.mxu0 0.0
    %1249 = vmatpush2.msra.mxu0 0.0
    %1250 = vmatprep.subr.mxu0 0.0
    %1251 = vmatpush2.msra.mxu0 0.0
    %1252 = vmatprep.subr.mxu0 0.0
    %1253 = vmatpush2.msra.mxu0 0.0
    %1254 = vmatprep.subr.mxu0 0.0
    %1255 = vmatpush2.msra.mxu0 0.0
    %1256 = vmatprep.subr.mxu0 0.0
    %1257 = vmatpush2.msra.mxu0 0.0
    %1258 = vmatprep.subr.mxu0 0.0
    %1259 = vmatpush2.msra.mxu0 0.0
    %1260 = vmatprep.subr.mxu0 0.0
    %1261 = vmatpush2.msra.mxu0 0.0
    %1262 = vmatprep.subr.mxu0 0.0
    %1263 = vmatpush2.msra.mxu0 0.0
    %1264 = vmatprep.subr.mxu0 0.0
    %1265 = vmatpush2.msra.mxu0 0.0
    %1266 = vmatprep.subr.mxu0 0.0
    %1267 = vmatpush2.msra.mxu0 0.0
    %1268 = vmatprep.subr.mxu0 0.0
    %1269 = vmatpush2.msra.mxu0 0.0
    %1270 = vmatprep.mubr.f32.mxu0 0.0
    %1271 = vmatmul.mubr.f32.gmra.mxu0 %v1204
    %v1272 = vpop.f32.mrf.mxu0
    %v1273 = vadd.f32 %v1201, %v1272
    %v1274 = vpop.f32.mrf.mxu0
    %1275 = vdwg.mxu0
    %1276 = vst [vmem:[#allocation10] sm:$0xff] 0.0
    %vm1277 = vcmask 254976
    %1278 = vst.msk [vmem:[#allocation10] sm:$0x3] %vm1277, %v1041
    %1280 = vrot.lane.b32.xlu0 %v1015, 96
    %v1281 = vpop.permute.xlu0 %1280
    %1283 = vst.msk [vmem:[#allocation10 + $0x4] sm:$0x3] %vm1277, %v1281
    %1285 = vst.msk [vmem:[#allocation10 + $0x2] sm:$0x3] %vm1277, %v1125
    %1287 = vrot.lane.b32.xlu0 %v1109, 96
    %v1288 = vpop.permute.xlu0 %1287
    %1290 = vst.msk [vmem:[#allocation10 + $0x6] sm:$0x3] %vm1277, %v1288
    %1292 = vrot.lane.b32.xlu0 %v1273, 32
    %v1293 = vpop.permute.xlu0 %1292
    %vm1295 = vcmask 263424
    %1296 = vst.msk [vmem:[#allocation10] sm:$0x3] %vm1295, %v1293
    // Predicated region
    $region34: #{tpu_custom_call.1} parent=1 // pred_check
      _
    $region35: #{tpu_custom_call.1} parent=1 // pred_check_branch
      %1298 = sbr.rel (0) target = $region37
    $region36: #{tpu_custom_call.1} parent=1 // pred_region
      %s1300 = ssub.s32 128, 128
      %1301 = vsyncadd [#allocation4], %s1300
      %s1303 = sshll.u32 [#allocation10], 4
      %s1304 = int_to_ptr.vmem [resolvable:$true] %s1303
      %1306 = dma.vmem_to_hbm [thread:$0]  %s1304, 128, %s4, [#allocation4]
    $region37: #{tpu_custom_call.1} parent=1 // pred_fallthru
      _
    // Predicated region
    $region38: #{tpu_custom_call.1} parent=1 // pred_check
      _
    $region39: #{tpu_custom_call.1} parent=1 // pred_check_branch
      %1308 = sbr.rel (0) target = $region41
    $region40: #{tpu_custom_call.1} parent=1 // pred_region
      %1309 = dma.done [#allocation4], 128
    $region41: #{tpu_custom_call.1} parent=1 // pred_fallthru
      _
    %1310 = vsyncpa [#allocation3], 1
    %1311 = vsyncpa [#allocation6], 1
    %1312 = vsyncpa [#allocation9], 1
    %1313 = vsyncpa [#allocation4], 1

</llo_original>
